<compile_context>
chip_gen: v7x
topology: tpu7x:2x2x1
jax: 0.10.0
libtpu: 0.0.40
codegen_flags: <defaults>
</compile_context>

<pallas_src>
import functools

import jax
import jax.numpy as jnp
from jax.experimental import pallas as pl
from jax.experimental.pallas import tpu as pltpu


def _round_up(x, m):
    return ((x + m - 1) // m) * m


def _pack_weight_t(w, h, g, p, d_in, d_in_pad):
    """PyTorch gate-stacked weight (3H, d_in) -> transposed packed (d_in_pad, P):
    gate k occupies output lanes [k*G, k*G+H); padded rows/cols are zero."""
    w = jnp.asarray(w, jnp.float32)
    wt = w.T                                            # (d_in, 3H)
    out = jnp.zeros((d_in_pad, p), jnp.float32)
    for k in range(3):
        out = out.at[:d_in, k * g:k * g + h].set(wt[:, k * h:(k + 1) * h])
    return out


def prepare_gru_params(gru_params, hidden_size, embedding_dim):
    """One-time weight prep: transpose, gate-pack, fold r/z b_hh into the input
    bias, cast matmul operands to bf16.  Cache the result across calls."""
    h = hidden_size
    g = h if 3 * h <= 128 else _round_up(h, 128)        # gate stride (lanes)
    p = _round_up(3 * g, 128)                           # packed gate width
    d_pad = _round_up(embedding_dim, 128)
    prepared = []
    for layer, (w_ih, w_hh, b_ih, b_hh) in enumerate(gru_params):
        d_in = embedding_dim if layer == 0 else h
        d_in_pad = d_pad if layer == 0 else p           # layers>0 eat P-wide h
        wih_t = _pack_weight_t(w_ih, h, g, p, d_in, d_in_pad)   # (Kin, P)
        whh_t = _pack_weight_t(w_hh, h, g, p, h, p)             # (P, P)
        bi = jnp.asarray(b_ih, jnp.float32).reshape(3, h)
        bh = jnp.asarray(b_hh, jnp.float32).reshape(3, h)
        bih_c = jnp.zeros((1, p), jnp.float32)          # b_ih (+ b_hh for r,z)
        bhh_n = jnp.zeros((1, p), jnp.float32)          # b_hh for n only
        for k in range(3):
            comb = bi[k] + (bh[k] if k < 2 else 0.0)
            bih_c = bih_c.at[0, k * g:k * g + h].set(comb)
        bhh_n = bhh_n.at[0, 2 * g:2 * g + h].set(bh[2])
        prepared.append((wih_t.astype(jnp.bfloat16),
                         whh_t.astype(jnp.bfloat16),
                         bih_c, bhh_n))
    return prepared


def _fused_gru_kernel(*refs, seq_len, b_pad, num_layers, g_stride, p_width):
    """refs = (x, h0, [wih_t, whh_t, bih, bhhn] * L, out, h_n).

    x:   (S*Bp, Dp)  bf16 time-major embedded input (batch padded to Bp)
    h0:  (L, Bp, P)  f32 initial hidden state (real values in lanes [0,H))
    out: (S*Bp, P)   f32 last-layer per-step hidden states
    h_n: (L, Bp, P)  f32 final hidden state per layer
    """
    x_ref, h0_ref = refs[0], refs[1]
    w_refs = refs[2:2 + 4 * num_layers]
    out_ref = refs[2 + 4 * num_layers]
    hn_ref = refs[3 + 4 * num_layers]

    G, P = g_stride, p_width

    wih = [w_refs[4 * l + 0][...] for l in range(num_layers)]   # bf16 (Kin,P)
    whh = [w_refs[4 * l + 1][...] for l in range(num_layers)]   # bf16 (P,P)
    bih = [w_refs[4 * l + 2][...] for l in range(num_layers)]   # f32 (1,P)
    bhhn = [w_refs[4 * l + 3][...] for l in range(num_layers)]  # f32 (1,P)

    # Hoisted layer-0 input projection over the whole sequence (off the serial
    # chain): one bf16 MXU matmul + combined bias.  ~1 MiB at this size; chunk
    # over time blocks when scaling S (v7x VMEM budget).
    gi0_all = jnp.dot(x_ref[...], wih[0],
                      preferred_element_type=jnp.float32) + bih[0]   # (S*Bp,P)

    h = [h0_ref[l] for l in range(num_layers)]                 # f32 (Bp,P)
    hb = [h[l].astype(jnp.bfloat16) for l in range(num_layers)]

    def gru_cell(gi, h_prev, hb_prev, l):
        # Single packed recurrent matmul (bf16 operands, f32 accumulate).
        gh = jnp.dot(hb_prev, whh[l], preferred_element_type=jnp.float32)
        sig = jax.nn.sigmoid(gi + gh)                   # r,z lanes valid
        # Align r (lanes [0,H)) with the n lanes (lanes [2G,2G+H)) via XLU roll.
        r_on_n = pltpu.roll(sig, 2 * G, axis=1)
        n = jnp.tanh(gi + r_on_n * (gh + bhhn[l]))      # n lanes valid
        z0 = pltpu.roll(sig, (P - G) % P, axis=1)       # z -> lanes [0,H)
        n0 = pltpu.roll(n, (P - 2 * G) % P, axis=1)     # n -> lanes [0,H)
        # Padded lanes stay bounded garbage; they only ever hit zero weight
        # rows and are sliced off outside the kernel.
        return (1.0 - z0) * n0 + z0 * h_prev

    # Wavefront over the (layer, time) grid: layer l step t only depends on
    # layer l-1 step t and layer l step t-1, so the two layers' chains overlap.
    inter_bf = [[None] * seq_len for _ in range(num_layers)]
    for d in range(seq_len + num_layers - 1):
        for l in range(num_layers):
            t = d - l
            if t < 0 or t >= seq_len:
                continue
            if l == 0:
                gi = gi0_all[t * b_pad:(t + 1) * b_pad, :]
            else:
                gi = jnp.dot(inter_bf[l - 1][t], wih[l],
                             preferred_element_type=jnp.float32) + bih[l]
            h_new = gru_cell(gi, h[l], hb[l], l)
            h[l] = h_new
            hb[l] = h_new.astype(jnp.bfloat16)
            if l < num_layers - 1:
                inter_bf[l][t] = hb[l]          # stays in registers, no VMEM
            else:
                out_ref[pl.ds(t * b_pad, b_pad), :] = h_new

    for l in range(num_layers):
        hn_ref[l] = h[l]


def toy_nn_forward(inp, hidden, emb_table, prepared_params):
    """ToyNN.forward: (output, h_n) like nn.GRU(..., batch_first=True).

    inp:    (B, S) int32 token ids
    hidden: (num_layers, B, H)
    prepared_params: output of prepare_gru_params (cached).
    """
    B, S = inp.shape
    L, _, H = hidden.shape
    G = H if 3 * H <= 128 else _round_up(H, 128)
    P = prepared_params[0][1].shape[1]              # whh_t: (P, P)
    d_pad = prepared_params[0][0].shape[0]          # wih0_t: (Dp, P)
    b_pad = _round_up(max(B, 1), 8)

    # Embedding lookup (frozen table) — plain JAX gather outside the kernel.
    x = emb_table[inp].astype(jnp.float32)                       # (B, S, D)
    D = x.shape[-1]
    # Time-major, batch padded to a sublane multiple, D padded to a lane
    # multiple, flattened so step t is the aligned slab rows [t*Bp, (t+1)*Bp).
    x = jnp.transpose(x, (1, 0, 2))                              # (S, B, D)
    x = jnp.pad(x, ((0, 0), (0, b_pad - B), (0, d_pad - D)))
    x = x.reshape(S * b_pad, d_pad).astype(jnp.bfloat16)         # bf16 MXU op

    h0 = jnp.pad(hidden.astype(jnp.float32),
                 ((0, 0), (0, b_pad - B), (0, P - H)))           # (L, Bp, P)

    in_specs = [
        pl.BlockSpec((S * b_pad, d_pad), lambda i: (0, 0)),
        pl.BlockSpec((L, b_pad, P), lambda i: (0, 0, 0)),
    ]
    flat_w = []
    for wih_t, whh_t, bih, bhhn in prepared_params:
        flat_w += [wih_t, whh_t, bih, bhhn]
        in_specs += [
            pl.BlockSpec(wih_t.shape, lambda i: (0, 0)),
            pl.BlockSpec(whh_t.shape, lambda i: (0, 0)),
            pl.BlockSpec(bih.shape, lambda i: (0, 0)),
            pl.BlockSpec(bhhn.shape, lambda i: (0, 0)),
        ]

    kernel = functools.partial(_fused_gru_kernel, seq_len=S, b_pad=b_pad,
                               num_layers=L, g_stride=G, p_width=P)

    out_flat, hn_pad = pl.pallas_call(
        kernel,
        out_shape=(jax.ShapeDtypeStruct((S * b_pad, P), jnp.float32),
                   jax.ShapeDtypeStruct((L, b_pad, P), jnp.float32)),
        grid_spec=pltpu.PrefetchScalarGridSpec(
            num_scalar_prefetch=0,
            grid=(1,),                               # single invocation
            in_specs=in_specs,
            out_specs=(pl.BlockSpec((S * b_pad, P), lambda i: (0, 0)),
                       pl.BlockSpec((L, b_pad, P), lambda i: (0, 0, 0))),
        ),
        compiler_params=pltpu.CompilerParams(
            dimension_semantics=("arbitrary",)),
    )(x, h0, *flat_w)

    out = out_flat.reshape(S, b_pad, P)[:, :B, :H]               # (S, B, H)
    output = jnp.transpose(out, (1, 0, 2))                       # (B, S, H)
    h_n = hn_pad[:, :B, :H]                                      # (L, B, H)
    return output, h_n


def _gru_reference(inp, hidden, emb_table, gru_params):
    """Pure-JAX f32 reference (lax.scan) for correctness checking."""
    x = jnp.transpose(emb_table[inp], (1, 0, 2))  # (S, B, D)
    h_finals = []
    for layer_idx, (w_ih, w_hh, b_ih, b_hh) in enumerate(gru_params):
        H = hidden.shape[-1]

        def step(h, x_t, w_ih=w_ih, w_hh=w_hh, b_ih=b_ih, b_hh=b_hh, H=H):
            gi = x_t @ w_ih.T + b_ih
            gh = h @ w_hh.T + b_hh
            r = jax.nn.sigmoid(gi[:, :H] + gh[:, :H])
            z = jax.nn.sigmoid(gi[:, H:2 * H] + gh[:, H:2 * H])
            n = jnp.tanh(gi[:, 2 * H:] + r * gh[:, 2 * H:])
            h_new = (1.0 - z) * n + z * h
            return h_new, h_new

        h_last, outs = jax.lax.scan(step, hidden[layer_idx], x)
        h_finals.append(h_last)
        x = outs
    return jnp.transpose(x, (1, 0, 2)), jnp.stack(h_finals, axis=0)


if __name__ == "__main__":
    # Small, deterministic config consistent with the module:
    # GloVe-50d embedding table, GRU(hidden_size, num_layers), batch_first.
    vocab_size = 100
    embedding_dim = 50       # "6B.50" GloVe vectors
    hidden_size = 32
    num_layers = 2
    batch = 2
    seq = 8

    key = jax.random.PRNGKey(0)
    k_emb, k_inp, *k_w = jax.random.split(key, 2 + 4 * num_layers)

    # Deterministic synthetic "weights_matrix" (GloVe stand-in) + GRU params.
    emb_table = jax.random.normal(k_emb, (vocab_size, embedding_dim),
                                  jnp.float32)

    scale = 1.0 / jnp.sqrt(hidden_size)
    gru_params = []
    for layer in range(num_layers):
        in_dim = embedding_dim if layer == 0 else hidden_size
        kk = k_w[4 * layer: 4 * layer + 4]
        w_ih = jax.random.uniform(kk[0], (3 * hidden_size, in_dim),
                                  jnp.float32, -scale, scale)
        w_hh = jax.random.uniform(kk[1], (3 * hidden_size, hidden_size),
                                  jnp.float32, -scale, scale)
        b_ih = jax.random.uniform(kk[2], (3 * hidden_size,),
                                  jnp.float32, -scale, scale)
        b_hh = jax.random.uniform(kk[3], (3 * hidden_size,),
                                  jnp.float32, -scale, scale)
        gru_params.append((w_ih, w_hh, b_ih, b_hh))

    inp = jax.random.randint(k_inp, (batch, seq), 0, vocab_size, jnp.int32)
    hidden0 = jnp.zeros((num_layers, batch, hidden_size), jnp.float32)

    # One-time weight prep (transpose + gate-pack + bias fold + bf16 cast).
    prepared = prepare_gru_params(gru_params, hidden_size, embedding_dim)
    forward = jax.jit(toy_nn_forward)

    output, h_n = forward(inp, hidden0, emb_table, prepared)
    output = jax.block_until_ready(output)
    h_n = jax.block_until_ready(h_n)

    # Sanity-check against pure-JAX f32 reference.  Tolerance is loosened
    # because the kernel feeds the MXU bf16 operands (f32 accumulate).
    ref_out, ref_hn = _gru_reference(inp, hidden0, emb_table, gru_params)
    assert output.shape == (batch, seq, hidden_size)
    assert h_n.shape == (num_layers, batch, hidden_size)
    assert jnp.allclose(output, ref_out, atol=3e-2, rtol=3e-2)
    assert jnp.allclose(h_n, ref_hn, atol=3e-2, rtol=3e-2)

    print("KERNEL_OK")
</pallas_src>

<mosaic_0001>
module attributes {stable_mosaic.version = 11 : i64} {
  func.func @_fused_gru_kernel(%arg0: i32, %arg1: memref<64x128xbf16, #tpu.memory_space<vmem>>, %arg2: memref<2x8x128xf32, #tpu.memory_space<vmem>>, %arg3: memref<128x128xbf16, #tpu.memory_space<vmem>>, %arg4: memref<128x128xbf16, #tpu.memory_space<vmem>>, %arg5: memref<1x128xf32, #tpu.memory_space<vmem>>, %arg6: memref<1x128xf32, #tpu.memory_space<vmem>>, %arg7: memref<128x128xbf16, #tpu.memory_space<vmem>>, %arg8: memref<128x128xbf16, #tpu.memory_space<vmem>>, %arg9: memref<1x128xf32, #tpu.memory_space<vmem>>, %arg10: memref<1x128xf32, #tpu.memory_space<vmem>>, %arg11: memref<64x128xf32, #tpu.memory_space<vmem>>, %arg12: memref<2x8x128xf32, #tpu.memory_space<vmem>>) attributes {dimension_semantics = [#tpu.dimension_semantics<arbitrary>], iteration_bounds = array<i64: 1>, scalar_prefetch = 0 : i64, scratch_operands = 0 : i64, tpu.core_type = #tpu.core_type<tc>, window_params = [{pipeline_mode = #tpu.pipeline_mode<synchronous>, transform_indices = @transform_0, window_bounds = array<i64: 64, 128>}, {pipeline_mode = #tpu.pipeline_mode<synchronous>, transform_indices = @transform_1, window_bounds = array<i64: 2, 8, 128>}, {pipeline_mode = #tpu.pipeline_mode<synchronous>, transform_indices = @transform_2, window_bounds = array<i64: 128, 128>}, {pipeline_mode = #tpu.pipeline_mode<synchronous>, transform_indices = @transform_3, window_bounds = array<i64: 128, 128>}, {pipeline_mode = #tpu.pipeline_mode<synchronous>, transform_indices = @transform_4, window_bounds = array<i64: 1, 128>}, {pipeline_mode = #tpu.pipeline_mode<synchronous>, transform_indices = @transform_5, window_bounds = array<i64: 1, 128>}, {pipeline_mode = #tpu.pipeline_mode<synchronous>, transform_indices = @transform_6, window_bounds = array<i64: 128, 128>}, {pipeline_mode = #tpu.pipeline_mode<synchronous>, transform_indices = @transform_7, window_bounds = array<i64: 128, 128>}, {pipeline_mode = #tpu.pipeline_mode<synchronous>, transform_indices = @transform_8, window_bounds = array<i64: 1, 128>}, {pipeline_mode = #tpu.pipeline_mode<synchronous>, transform_indices = @transform_9, window_bounds = array<i64: 1, 128>}, {pipeline_mode = #tpu.pipeline_mode<synchronous>, transform_indices = @transform_10, window_bounds = array<i64: 64, 128>}, {pipeline_mode = #tpu.pipeline_mode<synchronous>, transform_indices = @transform_11, window_bounds = array<i64: 2, 8, 128>}]} {
    %c0 = arith.constant 0 : index
    %c0_0 = arith.constant 0 : index
    %0 = vector.load %arg3[%c0, %c0_0] : memref<128x128xbf16, #tpu.memory_space<vmem>>, vector<128x128xbf16>
    %c0_1 = arith.constant 0 : index
    %c0_2 = arith.constant 0 : index
    %1 = vector.load %arg7[%c0_1, %c0_2] : memref<128x128xbf16, #tpu.memory_space<vmem>>, vector<128x128xbf16>
    %c0_3 = arith.constant 0 : index
    %c0_4 = arith.constant 0 : index
    %2 = vector.load %arg4[%c0_3, %c0_4] : memref<128x128xbf16, #tpu.memory_space<vmem>>, vector<128x128xbf16>
    %c0_5 = arith.constant 0 : index
    %c0_6 = arith.constant 0 : index
    %3 = vector.load %arg8[%c0_5, %c0_6] : memref<128x128xbf16, #tpu.memory_space<vmem>>, vector<128x128xbf16>
    %c0_7 = arith.constant 0 : index
    %c0_8 = arith.constant 0 : index
    %4 = vector.load %arg5[%c0_7, %c0_8] : memref<1x128xf32, #tpu.memory_space<vmem>>, vector<1x128xf32>
    %c0_9 = arith.constant 0 : index
    %c0_10 = arith.constant 0 : index
    %5 = vector.load %arg9[%c0_9, %c0_10] : memref<1x128xf32, #tpu.memory_space<vmem>>, vector<1x128xf32>
    %c0_11 = arith.constant 0 : index
    %c0_12 = arith.constant 0 : index
    %6 = vector.load %arg6[%c0_11, %c0_12] : memref<1x128xf32, #tpu.memory_space<vmem>>, vector<1x128xf32>
    %c0_13 = arith.constant 0 : index
    %c0_14 = arith.constant 0 : index
    %7 = vector.load %arg10[%c0_13, %c0_14] : memref<1x128xf32, #tpu.memory_space<vmem>>, vector<1x128xf32>
    %c0_15 = arith.constant 0 : index
    %c0_16 = arith.constant 0 : index
    %8 = vector.load %arg1[%c0_15, %c0_16] : memref<64x128xbf16, #tpu.memory_space<vmem>>, vector<64x128xbf16>
    %cst = arith.constant dense<0.000000e+00> : vector<64x128xf32>
    %9 = tpu.matmul %8, %0, %cst {dimension_numbers = #tpu.dot_dimension_numbers<[1], [0], [0], [1], [0, 0, 1, 1], [], []>} : vector<64x128xbf16>, vector<128x128xbf16>, vector<64x128xf32> -> vector<64x128xf32>
    %10 = vector.broadcast %4 : vector<1x128xf32> to vector<64x128xf32>
    %11 = arith.addf %9, %10 : vector<64x128xf32>
    %c0_17 = arith.constant 0 : index
    %c0_18 = arith.constant 0 : index
    %c0_19 = arith.constant 0 : index
    %12 = vector.load %arg2[%c0_17, %c0_18, %c0_19] : memref<2x8x128xf32, #tpu.memory_space<vmem>>, vector<1x8x128xf32>
    %13 = vector.shape_cast %12 : vector<1x8x128xf32> to vector<8x128xf32>
    %c1 = arith.constant 1 : index
    %c0_20 = arith.constant 0 : index
    %c0_21 = arith.constant 0 : index
    %14 = vector.load %arg2[%c1, %c0_20, %c0_21] : memref<2x8x128xf32, #tpu.memory_space<vmem>>, vector<1x8x128xf32>
    %15 = vector.shape_cast %14 : vector<1x8x128xf32> to vector<8x128xf32>
    %16 = arith.truncf %13 : vector<8x128xf32> to vector<8x128xbf16>
    %17 = arith.truncf %15 : vector<8x128xf32> to vector<8x128xbf16>
    %18 = vector.extract_strided_slice %11 {offsets = [0, 0], sizes = [8, 128], strides = [1, 1]} : vector<64x128xf32> to vector<8x128xf32>
    %cst_22 = arith.constant dense<0.000000e+00> : vector<8x128xf32>
    %19 = tpu.matmul %16, %2, %cst_22 {dimension_numbers = #tpu.dot_dimension_numbers<[1], [0], [0], [1], [0, 0, 1, 1], [], []>} : vector<8x128xbf16>, vector<128x128xbf16>, vector<8x128xf32> -> vector<8x128xf32>
    %20 = arith.addf %18, %19 : vector<8x128xf32>
    %21 = arith.negf %20 : vector<8x128xf32>
    %22 = math.exp %21 : vector<8x128xf32>
    %cst_23 = arith.constant 1.000000e+00 : f32
    %23 = vector.broadcast %cst_23 : f32 to vector<8x128xf32>
    %24 = arith.addf %23, %22 : vector<8x128xf32>
    %25 = arith.divf %23, %24 : vector<8x128xf32>
    %c64_i32 = arith.constant 64 : i32
    %26 = tpu.dynamic_rotate %25 by %c64_i32 dim 1 : vector<8x128xf32>, i32 -> vector<8x128xf32>
    %27 = vector.broadcast %6 : vector<1x128xf32> to vector<8x128xf32>
    %28 = arith.addf %19, %27 : vector<8x128xf32>
    %29 = arith.mulf %26, %28 : vector<8x128xf32>
    %30 = arith.addf %18, %29 : vector<8x128xf32>
    %31 = math.tanh %30 : vector<8x128xf32>
    %c96_i32 = arith.constant 96 : i32
    %32 = tpu.dynamic_rotate %25 by %c96_i32 dim 1 : vector<8x128xf32>, i32 -> vector<8x128xf32>
    %c64_i32_24 = arith.constant 64 : i32
    %33 = tpu.dynamic_rotate %31 by %c64_i32_24 dim 1 : vector<8x128xf32>, i32 -> vector<8x128xf32>
    %cst_25 = arith.constant 1.000000e+00 : f32
    %34 = vector.broadcast %cst_25 : f32 to vector<8x128xf32>
    %35 = arith.subf %34, %32 : vector<8x128xf32>
    %36 = arith.mulf %35, %33 : vector<8x128xf32>
    %37 = arith.mulf %32, %13 : vector<8x128xf32>
    %38 = arith.addf %36, %37 : vector<8x128xf32>
    %39 = arith.truncf %38 : vector<8x128xf32> to vector<8x128xbf16>
    %40 = vector.extract_strided_slice %11 {offsets = [8, 0], sizes = [8, 128], strides = [1, 1]} : vector<64x128xf32> to vector<8x128xf32>
    %cst_26 = arith.constant dense<0.000000e+00> : vector<8x128xf32>
    %41 = tpu.matmul %39, %2, %cst_26 {dimension_numbers = #tpu.dot_dimension_numbers<[1], [0], [0], [1], [0, 0, 1, 1], [], []>} : vector<8x128xbf16>, vector<128x128xbf16>, vector<8x128xf32> -> vector<8x128xf32>
    %42 = arith.addf %40, %41 : vector<8x128xf32>
    %43 = arith.negf %42 : vector<8x128xf32>
    %44 = math.exp %43 : vector<8x128xf32>
    %cst_27 = arith.constant 1.000000e+00 : f32
    %45 = vector.broadcast %cst_27 : f32 to vector<8x128xf32>
    %46 = arith.addf %45, %44 : vector<8x128xf32>
    %47 = arith.divf %45, %46 : vector<8x128xf32>
    %c64_i32_28 = arith.constant 64 : i32
    %48 = tpu.dynamic_rotate %47 by %c64_i32_28 dim 1 : vector<8x128xf32>, i32 -> vector<8x128xf32>
    %49 = vector.broadcast %6 : vector<1x128xf32> to vector<8x128xf32>
    %50 = arith.addf %41, %49 : vector<8x128xf32>
    %51 = arith.mulf %48, %50 : vector<8x128xf32>
    %52 = arith.addf %40, %51 : vector<8x128xf32>
    %53 = math.tanh %52 : vector<8x128xf32>
    %c96_i32_29 = arith.constant 96 : i32
    %54 = tpu.dynamic_rotate %47 by %c96_i32_29 dim 1 : vector<8x128xf32>, i32 -> vector<8x128xf32>
    %c64_i32_30 = arith.constant 64 : i32
    %55 = tpu.dynamic_rotate %53 by %c64_i32_30 dim 1 : vector<8x128xf32>, i32 -> vector<8x128xf32>
    %cst_31 = arith.constant 1.000000e+00 : f32
    %56 = vector.broadcast %cst_31 : f32 to vector<8x128xf32>
    %57 = arith.subf %56, %54 : vector<8x128xf32>
    %58 = arith.mulf %57, %55 : vector<8x128xf32>
    %59 = arith.mulf %54, %38 : vector<8x128xf32>
    %60 = arith.addf %58, %59 : vector<8x128xf32>
    %61 = arith.truncf %60 : vector<8x128xf32> to vector<8x128xbf16>
    %cst_32 = arith.constant dense<0.000000e+00> : vector<8x128xf32>
    %62 = tpu.matmul %39, %1, %cst_32 {dimension_numbers = #tpu.dot_dimension_numbers<[1], [0], [0], [1], [0, 0, 1, 1], [], []>} : vector<8x128xbf16>, vector<128x128xbf16>, vector<8x128xf32> -> vector<8x128xf32>
    %63 = vector.broadcast %5 : vector<1x128xf32> to vector<8x128xf32>
    %64 = arith.addf %62, %63 : vector<8x128xf32>
    %cst_33 = arith.constant dense<0.000000e+00> : vector<8x128xf32>
    %65 = tpu.matmul %17, %3, %cst_33 {dimension_numbers = #tpu.dot_dimension_numbers<[1], [0], [0], [1], [0, 0, 1, 1], [], []>} : vector<8x128xbf16>, vector<128x128xbf16>, vector<8x128xf32> -> vector<8x128xf32>
    %66 = arith.addf %64, %65 : vector<8x128xf32>
    %67 = arith.negf %66 : vector<8x128xf32>
    %68 = math.exp %67 : vector<8x128xf32>
    %cst_34 = arith.constant 1.000000e+00 : f32
    %69 = vector.broadcast %cst_34 : f32 to vector<8x128xf32>
    %70 = arith.addf %69, %68 : vector<8x128xf32>
    %71 = arith.divf %69, %70 : vector<8x128xf32>
    %c64_i32_35 = arith.constant 64 : i32
    %72 = tpu.dynamic_rotate %71 by %c64_i32_35 dim 1 : vector<8x128xf32>, i32 -> vector<8x128xf32>
    %73 = vector.broadcast %7 : vector<1x128xf32> to vector<8x128xf32>
    %74 = arith.addf %65, %73 : vector<8x128xf32>
    %75 = arith.mulf %72, %74 : vector<8x128xf32>
    %76 = arith.addf %64, %75 : vector<8x128xf32>
    %77 = math.tanh %76 : vector<8x128xf32>
    %c96_i32_36 = arith.constant 96 : i32
    %78 = tpu.dynamic_rotate %71 by %c96_i32_36 dim 1 : vector<8x128xf32>, i32 -> vector<8x128xf32>
    %c64_i32_37 = arith.constant 64 : i32
    %79 = tpu.dynamic_rotate %77 by %c64_i32_37 dim 1 : vector<8x128xf32>, i32 -> vector<8x128xf32>
    %cst_38 = arith.constant 1.000000e+00 : f32
    %80 = vector.broadcast %cst_38 : f32 to vector<8x128xf32>
    %81 = arith.subf %80, %78 : vector<8x128xf32>
    %82 = arith.mulf %81, %79 : vector<8x128xf32>
    %83 = arith.mulf %78, %15 : vector<8x128xf32>
    %84 = arith.addf %82, %83 : vector<8x128xf32>
    %85 = arith.truncf %84 : vector<8x128xf32> to vector<8x128xbf16>
    %c0_39 = arith.constant 0 : index
    %c0_40 = arith.constant 0 : index
    %86 = vector.load %arg11[%c0_39, %c0_40] : memref<64x128xf32, #tpu.memory_space<vmem>>, vector<8x128xf32>
    tpu.vector_store %arg11[%c0_39, %c0_40], %84 {strides = array<i32>} : memref<64x128xf32, #tpu.memory_space<vmem>>, vector<8x128xf32>,
    %87 = vector.extract_strided_slice %11 {offsets = [16, 0], sizes = [8, 128], strides = [1, 1]} : vector<64x128xf32> to vector<8x128xf32>
    %cst_41 = arith.constant dense<0.000000e+00> : vector<8x128xf32>
    %88 = tpu.matmul %61, %2, %cst_41 {dimension_numbers = #tpu.dot_dimension_numbers<[1], [0], [0], [1], [0, 0, 1, 1], [], []>} : vector<8x128xbf16>, vector<128x128xbf16>, vector<8x128xf32> -> vector<8x128xf32>
    %89 = arith.addf %87, %88 : vector<8x128xf32>
    %90 = arith.negf %89 : vector<8x128xf32>
    %91 = math.exp %90 : vector<8x128xf32>
    %cst_42 = arith.constant 1.000000e+00 : f32
    %92 = vector.broadcast %cst_42 : f32 to vector<8x128xf32>
    %93 = arith.addf %92, %91 : vector<8x128xf32>
    %94 = arith.divf %92, %93 : vector<8x128xf32>
    %c64_i32_43 = arith.constant 64 : i32
    %95 = tpu.dynamic_rotate %94 by %c64_i32_43 dim 1 : vector<8x128xf32>, i32 -> vector<8x128xf32>
    %96 = vector.broadcast %6 : vector<1x128xf32> to vector<8x128xf32>
    %97 = arith.addf %88, %96 : vector<8x128xf32>
    %98 = arith.mulf %95, %97 : vector<8x128xf32>
    %99 = arith.addf %87, %98 : vector<8x128xf32>
    %100 = math.tanh %99 : vector<8x128xf32>
    %c96_i32_44 = arith.constant 96 : i32
    %101 = tpu.dynamic_rotate %94 by %c96_i32_44 dim 1 : vector<8x128xf32>, i32 -> vector<8x128xf32>
    %c64_i32_45 = arith.constant 64 : i32
    %102 = tpu.dynamic_rotate %100 by %c64_i32_45 dim 1 : vector<8x128xf32>, i32 -> vector<8x128xf32>
    %cst_46 = arith.constant 1.000000e+00 : f32
    %103 = vector.broadcast %cst_46 : f32 to vector<8x128xf32>
    %104 = arith.subf %103, %101 : vector<8x128xf32>
    %105 = arith.mulf %104, %102 : vector<8x128xf32>
    %106 = arith.mulf %101, %60 : vector<8x128xf32>
    %107 = arith.addf %105, %106 : vector<8x128xf32>
    %108 = arith.truncf %107 : vector<8x128xf32> to vector<8x128xbf16>
    %cst_47 = arith.constant dense<0.000000e+00> : vector<8x128xf32>
    %109 = tpu.matmul %61, %1, %cst_47 {dimension_numbers = #tpu.dot_dimension_numbers<[1], [0], [0], [1], [0, 0, 1, 1], [], []>} : vector<8x128xbf16>, vector<128x128xbf16>, vector<8x128xf32> -> vector<8x128xf32>
    %110 = vector.broadcast %5 : vector<1x128xf32> to vector<8x128xf32>
    %111 = arith.addf %109, %110 : vector<8x128xf32>
    %cst_48 = arith.constant dense<0.000000e+00> : vector<8x128xf32>
    %112 = tpu.matmul %85, %3, %cst_48 {dimension_numbers = #tpu.dot_dimension_numbers<[1], [0], [0], [1], [0, 0, 1, 1], [], []>} : vector<8x128xbf16>, vector<128x128xbf16>, vector<8x128xf32> -> vector<8x128xf32>
    %113 = arith.addf %111, %112 : vector<8x128xf32>
    %114 = arith.negf %113 : vector<8x128xf32>
    %115 = math.exp %114 : vector<8x128xf32>
    %cst_49 = arith.constant 1.000000e+00 : f32
    %116 = vector.broadcast %cst_49 : f32 to vector<8x128xf32>
    %117 = arith.addf %116, %115 : vector<8x128xf32>
    %118 = arith.divf %116, %117 : vector<8x128xf32>
    %c64_i32_50 = arith.constant 64 : i32
    %119 = tpu.dynamic_rotate %118 by %c64_i32_50 dim 1 : vector<8x128xf32>, i32 -> vector<8x128xf32>
    %120 = vector.broadcast %7 : vector<1x128xf32> to vector<8x128xf32>
    %121 = arith.addf %112, %120 : vector<8x128xf32>
    %122 = arith.mulf %119, %121 : vector<8x128xf32>
    %123 = arith.addf %111, %122 : vector<8x128xf32>
    %124 = math.tanh %123 : vector<8x128xf32>
    %c96_i32_51 = arith.constant 96 : i32
    %125 = tpu.dynamic_rotate %118 by %c96_i32_51 dim 1 : vector<8x128xf32>, i32 -> vector<8x128xf32>
    %c64_i32_52 = arith.constant 64 : i32
    %126 = tpu.dynamic_rotate %124 by %c64_i32_52 dim 1 : vector<8x128xf32>, i32 -> vector<8x128xf32>
    %cst_53 = arith.constant 1.000000e+00 : f32
    %127 = vector.broadcast %cst_53 : f32 to vector<8x128xf32>
    %128 = arith.subf %127, %125 : vector<8x128xf32>
    %129 = arith.mulf %128, %126 : vector<8x128xf32>
    %130 = arith.mulf %125, %84 : vector<8x128xf32>
    %131 = arith.addf %129, %130 : vector<8x128xf32>
    %132 = arith.truncf %131 : vector<8x128xf32> to vector<8x128xbf16>
    %c8 = arith.constant 8 : index
    %c0_54 = arith.constant 0 : index
    %133 = vector.load %arg11[%c8, %c0_54] : memref<64x128xf32, #tpu.memory_space<vmem>>, vector<8x128xf32>
    tpu.vector_store %arg11[%c8, %c0_54], %131 {strides = array<i32>} : memref<64x128xf32, #tpu.memory_space<vmem>>, vector<8x128xf32>,
    %134 = vector.extract_strided_slice %11 {offsets = [24, 0], sizes = [8, 128], strides = [1, 1]} : vector<64x128xf32> to vector<8x128xf32>
    %cst_55 = arith.constant dense<0.000000e+00> : vector<8x128xf32>
    %135 = tpu.matmul %108, %2, %cst_55 {dimension_numbers = #tpu.dot_dimension_numbers<[1], [0], [0], [1], [0, 0, 1, 1], [], []>} : vector<8x128xbf16>, vector<128x128xbf16>, vector<8x128xf32> -> vector<8x128xf32>
    %136 = arith.addf %134, %135 : vector<8x128xf32>
    %137 = arith.negf %136 : vector<8x128xf32>
    %138 = math.exp %137 : vector<8x128xf32>
    %cst_56 = arith.constant 1.000000e+00 : f32
    %139 = vector.broadcast %cst_56 : f32 to vector<8x128xf32>
    %140 = arith.addf %139, %138 : vector<8x128xf32>
    %141 = arith.divf %139, %140 : vector<8x128xf32>
    %c64_i32_57 = arith.constant 64 : i32
    %142 = tpu.dynamic_rotate %141 by %c64_i32_57 dim 1 : vector<8x128xf32>, i32 -> vector<8x128xf32>
    %143 = vector.broadcast %6 : vector<1x128xf32> to vector<8x128xf32>
    %144 = arith.addf %135, %143 : vector<8x128xf32>
    %145 = arith.mulf %142, %144 : vector<8x128xf32>
    %146 = arith.addf %134, %145 : vector<8x128xf32>
    %147 = math.tanh %146 : vector<8x128xf32>
    %c96_i32_58 = arith.constant 96 : i32
    %148 = tpu.dynamic_rotate %141 by %c96_i32_58 dim 1 : vector<8x128xf32>, i32 -> vector<8x128xf32>
    %c64_i32_59 = arith.constant 64 : i32
    %149 = tpu.dynamic_rotate %147 by %c64_i32_59 dim 1 : vector<8x128xf32>, i32 -> vector<8x128xf32>
    %cst_60 = arith.constant 1.000000e+00 : f32
    %150 = vector.broadcast %cst_60 : f32 to vector<8x128xf32>
    %151 = arith.subf %150, %148 : vector<8x128xf32>
    %152 = arith.mulf %151, %149 : vector<8x128xf32>
    %153 = arith.mulf %148, %107 : vector<8x128xf32>
    %154 = arith.addf %152, %153 : vector<8x128xf32>
    %155 = arith.truncf %154 : vector<8x128xf32> to vector<8x128xbf16>
    %cst_61 = arith.constant dense<0.000000e+00> : vector<8x128xf32>
    %156 = tpu.matmul %108, %1, %cst_61 {dimension_numbers = #tpu.dot_dimension_numbers<[1], [0], [0], [1], [0, 0, 1, 1], [], []>} : vector<8x128xbf16>, vector<128x128xbf16>, vector<8x128xf32> -> vector<8x128xf32>
    %157 = vector.broadcast %5 : vector<1x128xf32> to vector<8x128xf32>
    %158 = arith.addf %156, %157 : vector<8x128xf32>
    %cst_62 = arith.constant dense<0.000000e+00> : vector<8x128xf32>
    %159 = tpu.matmul %132, %3, %cst_62 {dimension_numbers = #tpu.dot_dimension_numbers<[1], [0], [0], [1], [0, 0, 1, 1], [], []>} : vector<8x128xbf16>, vector<128x128xbf16>, vector<8x128xf32> -> vector<8x128xf32>
    %160 = arith.addf %158, %159 : vector<8x128xf32>
    %161 = arith.negf %160 : vector<8x128xf32>
    %162 = math.exp %161 : vector<8x128xf32>
    %cst_63 = arith.constant 1.000000e+00 : f32
    %163 = vector.broadcast %cst_63 : f32 to vector<8x128xf32>
    %164 = arith.addf %163, %162 : vector<8x128xf32>
    %165 = arith.divf %163, %164 : vector<8x128xf32>
    %c64_i32_64 = arith.constant 64 : i32
    %166 = tpu.dynamic_rotate %165 by %c64_i32_64 dim 1 : vector<8x128xf32>, i32 -> vector<8x128xf32>
    %167 = vector.broadcast %7 : vector<1x128xf32> to vector<8x128xf32>
    %168 = arith.addf %159, %167 : vector<8x128xf32>
    %169 = arith.mulf %166, %168 : vector<8x128xf32>
    %170 = arith.addf %158, %169 : vector<8x128xf32>
    %171 = math.tanh %170 : vector<8x128xf32>
    %c96_i32_65 = arith.constant 96 : i32
    %172 = tpu.dynamic_rotate %165 by %c96_i32_65 dim 1 : vector<8x128xf32>, i32 -> vector<8x128xf32>
    %c64_i32_66 = arith.constant 64 : i32
    %173 = tpu.dynamic_rotate %171 by %c64_i32_66 dim 1 : vector<8x128xf32>, i32 -> vector<8x128xf32>
    %cst_67 = arith.constant 1.000000e+00 : f32
    %174 = vector.broadcast %cst_67 : f32 to vector<8x128xf32>
    %175 = arith.subf %174, %172 : vector<8x128xf32>
    %176 = arith.mulf %175, %173 : vector<8x128xf32>
    %177 = arith.mulf %172, %131 : vector<8x128xf32>
    %178 = arith.addf %176, %177 : vector<8x128xf32>
    %179 = arith.truncf %178 : vector<8x128xf32> to vector<8x128xbf16>
    %c16 = arith.constant 16 : index
    %c0_68 = arith.constant 0 : index
    %180 = vector.load %arg11[%c16, %c0_68] : memref<64x128xf32, #tpu.memory_space<vmem>>, vector<8x128xf32>
    tpu.vector_store %arg11[%c16, %c0_68], %178 {strides = array<i32>} : memref<64x128xf32, #tpu.memory_space<vmem>>, vector<8x128xf32>,
    %181 = vector.extract_strided_slice %11 {offsets = [32, 0], sizes = [8, 128], strides = [1, 1]} : vector<64x128xf32> to vector<8x128xf32>
    %cst_69 = arith.constant dense<0.000000e+00> : vector<8x128xf32>
    %182 = tpu.matmul %155, %2, %cst_69 {dimension_numbers = #tpu.dot_dimension_numbers<[1], [0], [0], [1], [0, 0, 1, 1], [], []>} : vector<8x128xbf16>, vector<128x128xbf16>, vector<8x128xf32> -> vector<8x128xf32>
    %183 = arith.addf %181, %182 : vector<8x128xf32>
    %184 = arith.negf %183 : vector<8x128xf32>
    %185 = math.exp %184 : vector<8x128xf32>
    %cst_70 = arith.constant 1.000000e+00 : f32
    %186 = vector.broadcast %cst_70 : f32 to vector<8x128xf32>
    %187 = arith.addf %186, %185 : vector<8x128xf32>
    %188 = arith.divf %186, %187 : vector<8x128xf32>
    %c64_i32_71 = arith.constant 64 : i32
    %189 = tpu.dynamic_rotate %188 by %c64_i32_71 dim 1 : vector<8x128xf32>, i32 -> vector<8x128xf32>
    %190 = vector.broadcast %6 : vector<1x128xf32> to vector<8x128xf32>
    %191 = arith.addf %182, %190 : vector<8x128xf32>
    %192 = arith.mulf %189, %191 : vector<8x128xf32>
    %193 = arith.addf %181, %192 : vector<8x128xf32>
    %194 = math.tanh %193 : vector<8x128xf32>
    %c96_i32_72 = arith.constant 96 : i32
    %195 = tpu.dynamic_rotate %188 by %c96_i32_72 dim 1 : vector<8x128xf32>, i32 -> vector<8x128xf32>
    %c64_i32_73 = arith.constant 64 : i32
    %196 = tpu.dynamic_rotate %194 by %c64_i32_73 dim 1 : vector<8x128xf32>, i32 -> vector<8x128xf32>
    %cst_74 = arith.constant 1.000000e+00 : f32
    %197 = vector.broadcast %cst_74 : f32 to vector<8x128xf32>
    %198 = arith.subf %197, %195 : vector<8x128xf32>
    %199 = arith.mulf %198, %196 : vector<8x128xf32>
    %200 = arith.mulf %195, %154 : vector<8x128xf32>
    %201 = arith.addf %199, %200 : vector<8x128xf32>
    %202 = arith.truncf %201 : vector<8x128xf32> to vector<8x128xbf16>
    %cst_75 = arith.constant dense<0.000000e+00> : vector<8x128xf32>
    %203 = tpu.matmul %155, %1, %cst_75 {dimension_numbers = #tpu.dot_dimension_numbers<[1], [0], [0], [1], [0, 0, 1, 1], [], []>} : vector<8x128xbf16>, vector<128x128xbf16>, vector<8x128xf32> -> vector<8x128xf32>
    %204 = vector.broadcast %5 : vector<1x128xf32> to vector<8x128xf32>
    %205 = arith.addf %203, %204 : vector<8x128xf32>
    %cst_76 = arith.constant dense<0.000000e+00> : vector<8x128xf32>
    %206 = tpu.matmul %179, %3, %cst_76 {dimension_numbers = #tpu.dot_dimension_numbers<[1], [0], [0], [1], [0, 0, 1, 1], [], []>} : vector<8x128xbf16>, vector<128x128xbf16>, vector<8x128xf32> -> vector<8x128xf32>
    %207 = arith.addf %205, %206 : vector<8x128xf32>
    %208 = arith.negf %207 : vector<8x128xf32>
    %209 = math.exp %208 : vector<8x128xf32>
    %cst_77 = arith.constant 1.000000e+00 : f32
    %210 = vector.broadcast %cst_77 : f32 to vector<8x128xf32>
    %211 = arith.addf %210, %209 : vector<8x128xf32>
    %212 = arith.divf %210, %211 : vector<8x128xf32>
    %c64_i32_78 = arith.constant 64 : i32
    %213 = tpu.dynamic_rotate %212 by %c64_i32_78 dim 1 : vector<8x128xf32>, i32 -> vector<8x128xf32>
    %214 = vector.broadcast %7 : vector<1x128xf32> to vector<8x128xf32>
    %215 = arith.addf %206, %214 : vector<8x128xf32>
    %216 = arith.mulf %213, %215 : vector<8x128xf32>
    %217 = arith.addf %205, %216 : vector<8x128xf32>
    %218 = math.tanh %217 : vector<8x128xf32>
    %c96_i32_79 = arith.constant 96 : i32
    %219 = tpu.dynamic_rotate %212 by %c96_i32_79 dim 1 : vector<8x128xf32>, i32 -> vector<8x128xf32>
    %c64_i32_80 = arith.constant 64 : i32
    %220 = tpu.dynamic_rotate %218 by %c64_i32_80 dim 1 : vector<8x128xf32>, i32 -> vector<8x128xf32>
    %cst_81 = arith.constant 1.000000e+00 : f32
    %221 = vector.broadcast %cst_81 : f32 to vector<8x128xf32>
    %222 = arith.subf %221, %219 : vector<8x128xf32>
    %223 = arith.mulf %222, %220 : vector<8x128xf32>
    %224 = arith.mulf %219, %178 : vector<8x128xf32>
    %225 = arith.addf %223, %224 : vector<8x128xf32>
    %226 = arith.truncf %225 : vector<8x128xf32> to vector<8x128xbf16>
    %c24 = arith.constant 24 : index
    %c0_82 = arith.constant 0 : index
    %227 = vector.load %arg11[%c24, %c0_82] : memref<64x128xf32, #tpu.memory_space<vmem>>, vector<8x128xf32>
    tpu.vector_store %arg11[%c24, %c0_82], %225 {strides = array<i32>} : memref<64x128xf32, #tpu.memory_space<vmem>>, vector<8x128xf32>,
    %228 = vector.extract_strided_slice %11 {offsets = [40, 0], sizes = [8, 128], strides = [1, 1]} : vector<64x128xf32> to vector<8x128xf32>
    %cst_83 = arith.constant dense<0.000000e+00> : vector<8x128xf32>
    %229 = tpu.matmul %202, %2, %cst_83 {dimension_numbers = #tpu.dot_dimension_numbers<[1], [0], [0], [1], [0, 0, 1, 1], [], []>} : vector<8x128xbf16>, vector<128x128xbf16>, vector<8x128xf32> -> vector<8x128xf32>
    %230 = arith.addf %228, %229 : vector<8x128xf32>
    %231 = arith.negf %230 : vector<8x128xf32>
    %232 = math.exp %231 : vector<8x128xf32>
    %cst_84 = arith.constant 1.000000e+00 : f32
    %233 = vector.broadcast %cst_84 : f32 to vector<8x128xf32>
    %234 = arith.addf %233, %232 : vector<8x128xf32>
    %235 = arith.divf %233, %234 : vector<8x128xf32>
    %c64_i32_85 = arith.constant 64 : i32
    %236 = tpu.dynamic_rotate %235 by %c64_i32_85 dim 1 : vector<8x128xf32>, i32 -> vector<8x128xf32>
    %237 = vector.broadcast %6 : vector<1x128xf32> to vector<8x128xf32>
    %238 = arith.addf %229, %237 : vector<8x128xf32>
    %239 = arith.mulf %236, %238 : vector<8x128xf32>
    %240 = arith.addf %228, %239 : vector<8x128xf32>
    %241 = math.tanh %240 : vector<8x128xf32>
    %c96_i32_86 = arith.constant 96 : i32
    %242 = tpu.dynamic_rotate %235 by %c96_i32_86 dim 1 : vector<8x128xf32>, i32 -> vector<8x128xf32>
    %c64_i32_87 = arith.constant 64 : i32
    %243 = tpu.dynamic_rotate %241 by %c64_i32_87 dim 1 : vector<8x128xf32>, i32 -> vector<8x128xf32>
    %cst_88 = arith.constant 1.000000e+00 : f32
    %244 = vector.broadcast %cst_88 : f32 to vector<8x128xf32>
    %245 = arith.subf %244, %242 : vector<8x128xf32>
    %246 = arith.mulf %245, %243 : vector<8x128xf32>
    %247 = arith.mulf %242, %201 : vector<8x128xf32>
    %248 = arith.addf %246, %247 : vector<8x128xf32>
    %249 = arith.truncf %248 : vector<8x128xf32> to vector<8x128xbf16>
    %cst_89 = arith.constant dense<0.000000e+00> : vector<8x128xf32>
    %250 = tpu.matmul %202, %1, %cst_89 {dimension_numbers = #tpu.dot_dimension_numbers<[1], [0], [0], [1], [0, 0, 1, 1], [], []>} : vector<8x128xbf16>, vector<128x128xbf16>, vector<8x128xf32> -> vector<8x128xf32>
    %251 = vector.broadcast %5 : vector<1x128xf32> to vector<8x128xf32>
    %252 = arith.addf %250, %251 : vector<8x128xf32>
    %cst_90 = arith.constant dense<0.000000e+00> : vector<8x128xf32>
    %253 = tpu.matmul %226, %3, %cst_90 {dimension_numbers = #tpu.dot_dimension_numbers<[1], [0], [0], [1], [0, 0, 1, 1], [], []>} : vector<8x128xbf16>, vector<128x128xbf16>, vector<8x128xf32> -> vector<8x128xf32>
    %254 = arith.addf %252, %253 : vector<8x128xf32>
    %255 = arith.negf %254 : vector<8x128xf32>
    %256 = math.exp %255 : vector<8x128xf32>
    %cst_91 = arith.constant 1.000000e+00 : f32
    %257 = vector.broadcast %cst_91 : f32 to vector<8x128xf32>
    %258 = arith.addf %257, %256 : vector<8x128xf32>
    %259 = arith.divf %257, %258 : vector<8x128xf32>
    %c64_i32_92 = arith.constant 64 : i32
    %260 = tpu.dynamic_rotate %259 by %c64_i32_92 dim 1 : vector<8x128xf32>, i32 -> vector<8x128xf32>
    %261 = vector.broadcast %7 : vector<1x128xf32> to vector<8x128xf32>
    %262 = arith.addf %253, %261 : vector<8x128xf32>
    %263 = arith.mulf %260, %262 : vector<8x128xf32>
    %264 = arith.addf %252, %263 : vector<8x128xf32>
    %265 = math.tanh %264 : vector<8x128xf32>
    %c96_i32_93 = arith.constant 96 : i32
    %266 = tpu.dynamic_rotate %259 by %c96_i32_93 dim 1 : vector<8x128xf32>, i32 -> vector<8x128xf32>
    %c64_i32_94 = arith.constant 64 : i32
    %267 = tpu.dynamic_rotate %265 by %c64_i32_94 dim 1 : vector<8x128xf32>, i32 -> vector<8x128xf32>
    %cst_95 = arith.constant 1.000000e+00 : f32
    %268 = vector.broadcast %cst_95 : f32 to vector<8x128xf32>
    %269 = arith.subf %268, %266 : vector<8x128xf32>
    %270 = arith.mulf %269, %267 : vector<8x128xf32>
    %271 = arith.mulf %266, %225 : vector<8x128xf32>
    %272 = arith.addf %270, %271 : vector<8x128xf32>
    %273 = arith.truncf %272 : vector<8x128xf32> to vector<8x128xbf16>
    %c32 = arith.constant 32 : index
    %c0_96 = arith.constant 0 : index
    %274 = vector.load %arg11[%c32, %c0_96] : memref<64x128xf32, #tpu.memory_space<vmem>>, vector<8x128xf32>
    tpu.vector_store %arg11[%c32, %c0_96], %272 {strides = array<i32>} : memref<64x128xf32, #tpu.memory_space<vmem>>, vector<8x128xf32>,
    %275 = vector.extract_strided_slice %11 {offsets = [48, 0], sizes = [8, 128], strides = [1, 1]} : vector<64x128xf32> to vector<8x128xf32>
    %cst_97 = arith.constant dense<0.000000e+00> : vector<8x128xf32>
    %276 = tpu.matmul %249, %2, %cst_97 {dimension_numbers = #tpu.dot_dimension_numbers<[1], [0], [0], [1], [0, 0, 1, 1], [], []>} : vector<8x128xbf16>, vector<128x128xbf16>, vector<8x128xf32> -> vector<8x128xf32>
    %277 = arith.addf %275, %276 : vector<8x128xf32>
    %278 = arith.negf %277 : vector<8x128xf32>
    %279 = math.exp %278 : vector<8x128xf32>
    %cst_98 = arith.constant 1.000000e+00 : f32
    %280 = vector.broadcast %cst_98 : f32 to vector<8x128xf32>
    %281 = arith.addf %280, %279 : vector<8x128xf32>
    %282 = arith.divf %280, %281 : vector<8x128xf32>
    %c64_i32_99 = arith.constant 64 : i32
    %283 = tpu.dynamic_rotate %282 by %c64_i32_99 dim 1 : vector<8x128xf32>, i32 -> vector<8x128xf32>
    %284 = vector.broadcast %6 : vector<1x128xf32> to vector<8x128xf32>
    %285 = arith.addf %276, %284 : vector<8x128xf32>
    %286 = arith.mulf %283, %285 : vector<8x128xf32>
    %287 = arith.addf %275, %286 : vector<8x128xf32>
    %288 = math.tanh %287 : vector<8x128xf32>
    %c96_i32_100 = arith.constant 96 : i32
    %289 = tpu.dynamic_rotate %282 by %c96_i32_100 dim 1 : vector<8x128xf32>, i32 -> vector<8x128xf32>
    %c64_i32_101 = arith.constant 64 : i32
    %290 = tpu.dynamic_rotate %288 by %c64_i32_101 dim 1 : vector<8x128xf32>, i32 -> vector<8x128xf32>
    %cst_102 = arith.constant 1.000000e+00 : f32
    %291 = vector.broadcast %cst_102 : f32 to vector<8x128xf32>
    %292 = arith.subf %291, %289 : vector<8x128xf32>
    %293 = arith.mulf %292, %290 : vector<8x128xf32>
    %294 = arith.mulf %289, %248 : vector<8x128xf32>
    %295 = arith.addf %293, %294 : vector<8x128xf32>
    %296 = arith.truncf %295 : vector<8x128xf32> to vector<8x128xbf16>
    %cst_103 = arith.constant dense<0.000000e+00> : vector<8x128xf32>
    %297 = tpu.matmul %249, %1, %cst_103 {dimension_numbers = #tpu.dot_dimension_numbers<[1], [0], [0], [1], [0, 0, 1, 1], [], []>} : vector<8x128xbf16>, vector<128x128xbf16>, vector<8x128xf32> -> vector<8x128xf32>
    %298 = vector.broadcast %5 : vector<1x128xf32> to vector<8x128xf32>
    %299 = arith.addf %297, %298 : vector<8x128xf32>
    %cst_104 = arith.constant dense<0.000000e+00> : vector<8x128xf32>
    %300 = tpu.matmul %273, %3, %cst_104 {dimension_numbers = #tpu.dot_dimension_numbers<[1], [0], [0], [1], [0, 0, 1, 1], [], []>} : vector<8x128xbf16>, vector<128x128xbf16>, vector<8x128xf32> -> vector<8x128xf32>
    %301 = arith.addf %299, %300 : vector<8x128xf32>
    %302 = arith.negf %301 : vector<8x128xf32>
    %303 = math.exp %302 : vector<8x128xf32>
    %cst_105 = arith.constant 1.000000e+00 : f32
    %304 = vector.broadcast %cst_105 : f32 to vector<8x128xf32>
    %305 = arith.addf %304, %303 : vector<8x128xf32>
    %306 = arith.divf %304, %305 : vector<8x128xf32>
    %c64_i32_106 = arith.constant 64 : i32
    %307 = tpu.dynamic_rotate %306 by %c64_i32_106 dim 1 : vector<8x128xf32>, i32 -> vector<8x128xf32>
    %308 = vector.broadcast %7 : vector<1x128xf32> to vector<8x128xf32>
    %309 = arith.addf %300, %308 : vector<8x128xf32>
    %310 = arith.mulf %307, %309 : vector<8x128xf32>
    %311 = arith.addf %299, %310 : vector<8x128xf32>
    %312 = math.tanh %311 : vector<8x128xf32>
    %c96_i32_107 = arith.constant 96 : i32
    %313 = tpu.dynamic_rotate %306 by %c96_i32_107 dim 1 : vector<8x128xf32>, i32 -> vector<8x128xf32>
    %c64_i32_108 = arith.constant 64 : i32
    %314 = tpu.dynamic_rotate %312 by %c64_i32_108 dim 1 : vector<8x128xf32>, i32 -> vector<8x128xf32>
    %cst_109 = arith.constant 1.000000e+00 : f32
    %315 = vector.broadcast %cst_109 : f32 to vector<8x128xf32>
    %316 = arith.subf %315, %313 : vector<8x128xf32>
    %317 = arith.mulf %316, %314 : vector<8x128xf32>
    %318 = arith.mulf %313, %272 : vector<8x128xf32>
    %319 = arith.addf %317, %318 : vector<8x128xf32>
    %320 = arith.truncf %319 : vector<8x128xf32> to vector<8x128xbf16>
    %c40 = arith.constant 40 : index
    %c0_110 = arith.constant 0 : index
    %321 = vector.load %arg11[%c40, %c0_110] : memref<64x128xf32, #tpu.memory_space<vmem>>, vector<8x128xf32>
    tpu.vector_store %arg11[%c40, %c0_110], %319 {strides = array<i32>} : memref<64x128xf32, #tpu.memory_space<vmem>>, vector<8x128xf32>,
    %322 = vector.extract_strided_slice %11 {offsets = [56, 0], sizes = [8, 128], strides = [1, 1]} : vector<64x128xf32> to vector<8x128xf32>
    %cst_111 = arith.constant dense<0.000000e+00> : vector<8x128xf32>
    %323 = tpu.matmul %296, %2, %cst_111 {dimension_numbers = #tpu.dot_dimension_numbers<[1], [0], [0], [1], [0, 0, 1, 1], [], []>} : vector<8x128xbf16>, vector<128x128xbf16>, vector<8x128xf32> -> vector<8x128xf32>
    %324 = arith.addf %322, %323 : vector<8x128xf32>
    %325 = arith.negf %324 : vector<8x128xf32>
    %326 = math.exp %325 : vector<8x128xf32>
    %cst_112 = arith.constant 1.000000e+00 : f32
    %327 = vector.broadcast %cst_112 : f32 to vector<8x128xf32>
    %328 = arith.addf %327, %326 : vector<8x128xf32>
    %329 = arith.divf %327, %328 : vector<8x128xf32>
    %c64_i32_113 = arith.constant 64 : i32
    %330 = tpu.dynamic_rotate %329 by %c64_i32_113 dim 1 : vector<8x128xf32>, i32 -> vector<8x128xf32>
    %331 = vector.broadcast %6 : vector<1x128xf32> to vector<8x128xf32>
    %332 = arith.addf %323, %331 : vector<8x128xf32>
    %333 = arith.mulf %330, %332 : vector<8x128xf32>
    %334 = arith.addf %322, %333 : vector<8x128xf32>
    %335 = math.tanh %334 : vector<8x128xf32>
    %c96_i32_114 = arith.constant 96 : i32
    %336 = tpu.dynamic_rotate %329 by %c96_i32_114 dim 1 : vector<8x128xf32>, i32 -> vector<8x128xf32>
    %c64_i32_115 = arith.constant 64 : i32
    %337 = tpu.dynamic_rotate %335 by %c64_i32_115 dim 1 : vector<8x128xf32>, i32 -> vector<8x128xf32>
    %cst_116 = arith.constant 1.000000e+00 : f32
    %338 = vector.broadcast %cst_116 : f32 to vector<8x128xf32>
    %339 = arith.subf %338, %336 : vector<8x128xf32>
    %340 = arith.mulf %339, %337 : vector<8x128xf32>
    %341 = arith.mulf %336, %295 : vector<8x128xf32>
    %342 = arith.addf %340, %341 : vector<8x128xf32>
    %343 = arith.truncf %342 : vector<8x128xf32> to vector<8x128xbf16>
    %cst_117 = arith.constant dense<0.000000e+00> : vector<8x128xf32>
    %344 = tpu.matmul %296, %1, %cst_117 {dimension_numbers = #tpu.dot_dimension_numbers<[1], [0], [0], [1], [0, 0, 1, 1], [], []>} : vector<8x128xbf16>, vector<128x128xbf16>, vector<8x128xf32> -> vector<8x128xf32>
    %345 = vector.broadcast %5 : vector<1x128xf32> to vector<8x128xf32>
    %346 = arith.addf %344, %345 : vector<8x128xf32>
    %cst_118 = arith.constant dense<0.000000e+00> : vector<8x128xf32>
    %347 = tpu.matmul %320, %3, %cst_118 {dimension_numbers = #tpu.dot_dimension_numbers<[1], [0], [0], [1], [0, 0, 1, 1], [], []>} : vector<8x128xbf16>, vector<128x128xbf16>, vector<8x128xf32> -> vector<8x128xf32>
    %348 = arith.addf %346, %347 : vector<8x128xf32>
    %349 = arith.negf %348 : vector<8x128xf32>
    %350 = math.exp %349 : vector<8x128xf32>
    %cst_119 = arith.constant 1.000000e+00 : f32
    %351 = vector.broadcast %cst_119 : f32 to vector<8x128xf32>
    %352 = arith.addf %351, %350 : vector<8x128xf32>
    %353 = arith.divf %351, %352 : vector<8x128xf32>
    %c64_i32_120 = arith.constant 64 : i32
    %354 = tpu.dynamic_rotate %353 by %c64_i32_120 dim 1 : vector<8x128xf32>, i32 -> vector<8x128xf32>
    %355 = vector.broadcast %7 : vector<1x128xf32> to vector<8x128xf32>
    %356 = arith.addf %347, %355 : vector<8x128xf32>
    %357 = arith.mulf %354, %356 : vector<8x128xf32>
    %358 = arith.addf %346, %357 : vector<8x128xf32>
    %359 = math.tanh %358 : vector<8x128xf32>
    %c96_i32_121 = arith.constant 96 : i32
    %360 = tpu.dynamic_rotate %353 by %c96_i32_121 dim 1 : vector<8x128xf32>, i32 -> vector<8x128xf32>
    %c64_i32_122 = arith.constant 64 : i32
    %361 = tpu.dynamic_rotate %359 by %c64_i32_122 dim 1 : vector<8x128xf32>, i32 -> vector<8x128xf32>
    %cst_123 = arith.constant 1.000000e+00 : f32
    %362 = vector.broadcast %cst_123 : f32 to vector<8x128xf32>
    %363 = arith.subf %362, %360 : vector<8x128xf32>
    %364 = arith.mulf %363, %361 : vector<8x128xf32>
    %365 = arith.mulf %360, %319 : vector<8x128xf32>
    %366 = arith.addf %364, %365 : vector<8x128xf32>
    %367 = arith.truncf %366 : vector<8x128xf32> to vector<8x128xbf16>
    %c48 = arith.constant 48 : index
    %c0_124 = arith.constant 0 : index
    %368 = vector.load %arg11[%c48, %c0_124] : memref<64x128xf32, #tpu.memory_space<vmem>>, vector<8x128xf32>
    tpu.vector_store %arg11[%c48, %c0_124], %366 {strides = array<i32>} : memref<64x128xf32, #tpu.memory_space<vmem>>, vector<8x128xf32>,
    %cst_125 = arith.constant dense<0.000000e+00> : vector<8x128xf32>
    %369 = tpu.matmul %343, %1, %cst_125 {dimension_numbers = #tpu.dot_dimension_numbers<[1], [0], [0], [1], [0, 0, 1, 1], [], []>} : vector<8x128xbf16>, vector<128x128xbf16>, vector<8x128xf32> -> vector<8x128xf32>
    %370 = vector.broadcast %5 : vector<1x128xf32> to vector<8x128xf32>
    %371 = arith.addf %369, %370 : vector<8x128xf32>
    %cst_126 = arith.constant dense<0.000000e+00> : vector<8x128xf32>
    %372 = tpu.matmul %367, %3, %cst_126 {dimension_numbers = #tpu.dot_dimension_numbers<[1], [0], [0], [1], [0, 0, 1, 1], [], []>} : vector<8x128xbf16>, vector<128x128xbf16>, vector<8x128xf32> -> vector<8x128xf32>
    %373 = arith.addf %371, %372 : vector<8x128xf32>
    %374 = arith.negf %373 : vector<8x128xf32>
    %375 = math.exp %374 : vector<8x128xf32>
    %cst_127 = arith.constant 1.000000e+00 : f32
    %376 = vector.broadcast %cst_127 : f32 to vector<8x128xf32>
    %377 = arith.addf %376, %375 : vector<8x128xf32>
    %378 = arith.divf %376, %377 : vector<8x128xf32>
    %c64_i32_128 = arith.constant 64 : i32
    %379 = tpu.dynamic_rotate %378 by %c64_i32_128 dim 1 : vector<8x128xf32>, i32 -> vector<8x128xf32>
    %380 = vector.broadcast %7 : vector<1x128xf32> to vector<8x128xf32>
    %381 = arith.addf %372, %380 : vector<8x128xf32>
    %382 = arith.mulf %379, %381 : vector<8x128xf32>
    %383 = arith.addf %371, %382 : vector<8x128xf32>
    %384 = math.tanh %383 : vector<8x128xf32>
    %c96_i32_129 = arith.constant 96 : i32
    %385 = tpu.dynamic_rotate %378 by %c96_i32_129 dim 1 : vector<8x128xf32>, i32 -> vector<8x128xf32>
    %c64_i32_130 = arith.constant 64 : i32
    %386 = tpu.dynamic_rotate %384 by %c64_i32_130 dim 1 : vector<8x128xf32>, i32 -> vector<8x128xf32>
    %cst_131 = arith.constant 1.000000e+00 : f32
    %387 = vector.broadcast %cst_131 : f32 to vector<8x128xf32>
    %388 = arith.subf %387, %385 : vector<8x128xf32>
    %389 = arith.mulf %388, %386 : vector<8x128xf32>
    %390 = arith.mulf %385, %366 : vector<8x128xf32>
    %391 = arith.addf %389, %390 : vector<8x128xf32>
    %c56 = arith.constant 56 : index
    %c0_132 = arith.constant 0 : index
    %392 = vector.load %arg11[%c56, %c0_132] : memref<64x128xf32, #tpu.memory_space<vmem>>, vector<8x128xf32>
    tpu.vector_store %arg11[%c56, %c0_132], %391 {strides = array<i32>} : memref<64x128xf32, #tpu.memory_space<vmem>>, vector<8x128xf32>,
    %c0_133 = arith.constant 0 : index
    %c0_134 = arith.constant 0 : index
    %c0_135 = arith.constant 0 : index
    %393 = vector.load %arg12[%c0_133, %c0_134, %c0_135] : memref<2x8x128xf32, #tpu.memory_space<vmem>>, vector<1x8x128xf32>
    %394 = vector.shape_cast %393 : vector<1x8x128xf32> to vector<8x128xf32>
    %395 = vector.shape_cast %342 : vector<8x128xf32> to vector<1x8x128xf32>
    tpu.vector_store %arg12[%c0_133, %c0_134, %c0_135], %395 {strides = array<i32>} : memref<2x8x128xf32, #tpu.memory_space<vmem>>, vector<1x8x128xf32>,
    %c1_136 = arith.constant 1 : index
    %c0_137 = arith.constant 0 : index
    %c0_138 = arith.constant 0 : index
    %396 = vector.load %arg12[%c1_136, %c0_137, %c0_138] : memref<2x8x128xf32, #tpu.memory_space<vmem>>, vector<1x8x128xf32>
    %397 = vector.shape_cast %396 : vector<1x8x128xf32> to vector<8x128xf32>
    %398 = vector.shape_cast %391 : vector<8x128xf32> to vector<1x8x128xf32>
    tpu.vector_store %arg12[%c1_136, %c0_137, %c0_138], %398 {strides = array<i32>} : memref<2x8x128xf32, #tpu.memory_space<vmem>>, vector<1x8x128xf32>,
    return
  }
  func.func @transform_0(%arg0: i32) -> (i32, i32) {
    %c0_i32 = arith.constant 0 : i32
    %c0_i32_0 = arith.constant 0 : i32
    %c0_i32_1 = arith.constant 0 : i32
    return %c0_i32, %c0_i32_0 : i32, i32
  }
  func.func @transform_1(%arg0: i32) -> (i32, i32, i32) {
    %c0_i32 = arith.constant 0 : i32
    %c0_i32_0 = arith.constant 0 : i32
    %c0_i32_1 = arith.constant 0 : i32
    %c0_i32_2 = arith.constant 0 : i32
    return %c0_i32, %c0_i32_0, %c0_i32_1 : i32, i32, i32
  }
  func.func @transform_2(%arg0: i32) -> (i32, i32) {
    %c0_i32 = arith.constant 0 : i32
    %c0_i32_0 = arith.constant 0 : i32
    %c0_i32_1 = arith.constant 0 : i32
    return %c0_i32, %c0_i32_0 : i32, i32
  }
  func.func @transform_3(%arg0: i32) -> (i32, i32) {
    %c0_i32 = arith.constant 0 : i32
    %c0_i32_0 = arith.constant 0 : i32
    %c0_i32_1 = arith.constant 0 : i32
    return %c0_i32, %c0_i32_0 : i32, i32
  }
  func.func @transform_4(%arg0: i32) -> (i32, i32) {
    %c0_i32 = arith.constant 0 : i32
    %c0_i32_0 = arith.constant 0 : i32
    %c0_i32_1 = arith.constant 0 : i32
    return %c0_i32, %c0_i32_0 : i32, i32
  }
  func.func @transform_5(%arg0: i32) -> (i32, i32) {
    %c0_i32 = arith.constant 0 : i32
    %c0_i32_0 = arith.constant 0 : i32
    %c0_i32_1 = arith.constant 0 : i32
    return %c0_i32, %c0_i32_0 : i32, i32
  }
  func.func @transform_6(%arg0: i32) -> (i32, i32) {
    %c0_i32 = arith.constant 0 : i32
    %c0_i32_0 = arith.constant 0 : i32
    %c0_i32_1 = arith.constant 0 : i32
    return %c0_i32, %c0_i32_0 : i32, i32
  }
  func.func @transform_7(%arg0: i32) -> (i32, i32) {
    %c0_i32 = arith.constant 0 : i32
    %c0_i32_0 = arith.constant 0 : i32
    %c0_i32_1 = arith.constant 0 : i32
    return %c0_i32, %c0_i32_0 : i32, i32
  }
  func.func @transform_8(%arg0: i32) -> (i32, i32) {
    %c0_i32 = arith.constant 0 : i32
    %c0_i32_0 = arith.constant 0 : i32
    %c0_i32_1 = arith.constant 0 : i32
    return %c0_i32, %c0_i32_0 : i32, i32
  }
  func.func @transform_9(%arg0: i32) -> (i32, i32) {
    %c0_i32 = arith.constant 0 : i32
    %c0_i32_0 = arith.constant 0 : i32
    %c0_i32_1 = arith.constant 0 : i32
    return %c0_i32, %c0_i32_0 : i32, i32
  }
  func.func @transform_10(%arg0: i32) -> (i32, i32) {
    %c0_i32 = arith.constant 0 : i32
    %c0_i32_0 = arith.constant 0 : i32
    %c0_i32_1 = arith.constant 0 : i32
    return %c0_i32, %c0_i32_0 : i32, i32
  }
  func.func @transform_11(%arg0: i32) -> (i32, i32, i32) {
    %c0_i32 = arith.constant 0 : i32
    %c0_i32_0 = arith.constant 0 : i32
    %c0_i32_1 = arith.constant 0 : i32
    %c0_i32_2 = arith.constant 0 : i32
    return %c0_i32, %c0_i32_0, %c0_i32_1 : i32, i32, i32
  }
}

</mosaic_0001>

<llo_original>
// kernel: toy_nn_forward.1
$region0: #{toy_nn_forward.1}
  #allocation0 [shape = 'u32[]', space=smem, size = 0x4, offset = 0x4, fixed_abs, tag = 'smem constant byte address 0x4 - core index']
  #allocation1 [shape = 'u32[144,128]{1,0:T(1,128)}', space=vmem, size = 0x12000, scoped, tag = 'internal scratch']
  %s0 = inlined_call_operand.vmem [shape: bf16[64,128], index: 0, kind: input, shape index: {}]
  %s1 = inlined_call_operand.vmem [shape: f32[2,8,128], index: 1, kind: input, shape index: {}]
  %s2 = inlined_call_operand.vmem [shape: bf16[128,128], index: 2, kind: input, shape index: {}]
  %s3 = inlined_call_operand.vmem [shape: bf16[128,128], index: 3, kind: input, shape index: {}]
  %s4 = inlined_call_operand.vmem [shape: f32[1,128], index: 4, kind: input, shape index: {}]
  %s5 = inlined_call_operand.vmem [shape: f32[1,128], index: 5, kind: input, shape index: {}]
  %s6 = inlined_call_operand.vmem [shape: bf16[128,128], index: 6, kind: input, shape index: {}]
  %s7 = inlined_call_operand.vmem [shape: bf16[128,128], index: 7, kind: input, shape index: {}]
  %s8 = inlined_call_operand.vmem [shape: f32[1,128], index: 8, kind: input, shape index: {}]
  %s9 = inlined_call_operand.vmem [shape: f32[1,128], index: 9, kind: input, shape index: {}]
  %s10 = inlined_call_operand.vmem [shape: f32[64,128], index: 10, kind: output, shape index: {0}]
  %s11 = inlined_call_operand.vmem [shape: f32[2,8,128], index: 11, kind: output, shape index: {1}]
  %12 = xla_tuple %s10, %s11
  %s13 = sld [smem:[#allocation0]]
  $region58: #{toy_nn_forward.1} parent=0
    _
  %s15 = ssub.s32 1, %s13
  %s16 = scalar_select 0, %s15, %s13
  // Predicated region
  $region2: #{toy_nn_forward.1} parent=0 // pred_check
    _
  $region3: #{toy_nn_forward.1} parent=0 // pred_check_branch
    %18 = sbr.rel (0) target = $region5
  $region4: #{toy_nn_forward.1} parent=0 // pred_region
    _
  $region5: #{toy_nn_forward.1} parent=0 // pred_fallthru
    _
  // Predicated region
  $region6: #{toy_nn_forward.1} parent=0 // pred_check
    _
  $region7: #{toy_nn_forward.1} parent=0 // pred_check_branch
    %20 = sbr.rel (0) target = $region9
  $region8: #{toy_nn_forward.1} parent=0 // pred_region
    _
  $region9: #{toy_nn_forward.1} parent=0 // pred_fallthru
    _
  // Predicated region
  $region10: #{toy_nn_forward.1} parent=0 // pred_check
    _
  $region11: #{toy_nn_forward.1} parent=0 // pred_check_branch
    %22 = sbr.rel (0) target = $region13
  $region12: #{toy_nn_forward.1} parent=0 // pred_region
    _
  $region13: #{toy_nn_forward.1} parent=0 // pred_fallthru
    _
  // Predicated region
  $region14: #{toy_nn_forward.1} parent=0 // pred_check
    _
  $region15: #{toy_nn_forward.1} parent=0 // pred_check_branch
    %24 = sbr.rel (0) target = $region17
  $region16: #{toy_nn_forward.1} parent=0 // pred_region
    _
  $region17: #{toy_nn_forward.1} parent=0 // pred_fallthru
    _
  // Predicated region
  $region18: #{toy_nn_forward.1} parent=0 // pred_check
    _
  $region19: #{toy_nn_forward.1} parent=0 // pred_check_branch
    %26 = sbr.rel (0) target = $region21
  $region20: #{toy_nn_forward.1} parent=0 // pred_region
    _
  $region21: #{toy_nn_forward.1} parent=0 // pred_fallthru
    _
  // Predicated region
  $region22: #{toy_nn_forward.1} parent=0 // pred_check
    _
  $region23: #{toy_nn_forward.1} parent=0 // pred_check_branch
    %28 = sbr.rel (0) target = $region25
  $region24: #{toy_nn_forward.1} parent=0 // pred_region
    _
  $region25: #{toy_nn_forward.1} parent=0 // pred_fallthru
    _
  // Predicated region
  $region26: #{toy_nn_forward.1} parent=0 // pred_check
    _
  $region27: #{toy_nn_forward.1} parent=0 // pred_check_branch
    %30 = sbr.rel (0) target = $region29
  $region28: #{toy_nn_forward.1} parent=0 // pred_region
    _
  $region29: #{toy_nn_forward.1} parent=0 // pred_fallthru
    _
  // Predicated region
  $region30: #{toy_nn_forward.1} parent=0 // pred_check
    _
  $region31: #{toy_nn_forward.1} parent=0 // pred_check_branch
    %32 = sbr.rel (0) target = $region33
  $region32: #{toy_nn_forward.1} parent=0 // pred_region
    _
  $region33: #{toy_nn_forward.1} parent=0 // pred_fallthru
    _
  // Predicated region
  $region34: #{toy_nn_forward.1} parent=0 // pred_check
    _
  $region35: #{toy_nn_forward.1} parent=0 // pred_check_branch
    %34 = sbr.rel (0) target = $region37
  $region36: #{toy_nn_forward.1} parent=0 // pred_region
    _
  $region37: #{toy_nn_forward.1} parent=0 // pred_fallthru
    _
  // Predicated region
  $region38: #{toy_nn_forward.1} parent=0 // pred_check
    _
  $region39: #{toy_nn_forward.1} parent=0 // pred_check_branch
    %36 = sbr.rel (0) target = $region41
  $region40: #{toy_nn_forward.1} parent=0 // pred_region
    _
  $region41: #{toy_nn_forward.1} parent=0 // pred_fallthru
    _
  %v38 = vld [vmem:[%s2] sm:$0xf]
  %v39 = vld [vmem:[%s2 + $0x4] sm:$0xf]
  %v40 = vld [vmem:[%s2 + $0x8] sm:$0xf]
  %v41 = vld [vmem:[%s2 + $0xc] sm:$0xf]
  %v42 = vld [vmem:[%s2 + $0x10] sm:$0xf]
  %v43 = vld [vmem:[%s2 + $0x14] sm:$0xf]
  %v44 = vld [vmem:[%s2 + $0x18] sm:$0xf]
  %v45 = vld [vmem:[%s2 + $0x1c] sm:$0xf]
  %v46 = vld [vmem:[%s2 + $0x20] sm:$0xf]
  %v47 = vld [vmem:[%s2 + $0x24] sm:$0xf]
  %v48 = vld [vmem:[%s2 + $0x28] sm:$0xf]
  %v49 = vld [vmem:[%s2 + $0x2c] sm:$0xf]
  %v50 = vld [vmem:[%s2 + $0x30] sm:$0xf]
  %v51 = vld [vmem:[%s2 + $0x34] sm:$0xf]
  %v52 = vld [vmem:[%s2 + $0x38] sm:$0xf]
  %v53 = vld [vmem:[%s2 + $0x3c] sm:$0xf]
  %v54 = vld [vmem:[%s6] sm:$0xf]
  %v55 = vld [vmem:[%s6 + $0x4] sm:$0xf]
  %v56 = vld [vmem:[%s6 + $0x8] sm:$0xf]
  %v57 = vld [vmem:[%s6 + $0xc] sm:$0xf]
  %v58 = vld [vmem:[%s6 + $0x10] sm:$0xf]
  %v59 = vld [vmem:[%s6 + $0x14] sm:$0xf]
  %v60 = vld [vmem:[%s6 + $0x18] sm:$0xf]
  %v61 = vld [vmem:[%s6 + $0x1c] sm:$0xf]
  %v62 = vld [vmem:[%s6 + $0x20] sm:$0xf]
  %v63 = vld [vmem:[%s6 + $0x24] sm:$0xf]
  %v64 = vld [vmem:[%s6 + $0x28] sm:$0xf]
  %v65 = vld [vmem:[%s6 + $0x2c] sm:$0xf]
  %v66 = vld [vmem:[%s6 + $0x30] sm:$0xf]
  %v67 = vld [vmem:[%s6 + $0x34] sm:$0xf]
  %v68 = vld [vmem:[%s6 + $0x38] sm:$0xf]
  %v69 = vld [vmem:[%s6 + $0x3c] sm:$0xf]
  %v70 = vld [vmem:[%s3] sm:$0xf]
  %v71 = vld [vmem:[%s3 + $0x4] sm:$0xf]
  %v72 = vld [vmem:[%s3 + $0x8] sm:$0xf]
  %v73 = vld [vmem:[%s3 + $0xc] sm:$0xf]
  %v74 = vld [vmem:[%s3 + $0x10] sm:$0xf]
  %v75 = vld [vmem:[%s3 + $0x14] sm:$0xf]
  %v76 = vld [vmem:[%s3 + $0x18] sm:$0xf]
  %v77 = vld [vmem:[%s3 + $0x1c] sm:$0xf]
  %v78 = vld [vmem:[%s3 + $0x20] sm:$0xf]
  %v79 = vld [vmem:[%s3 + $0x24] sm:$0xf]
  %v80 = vld [vmem:[%s3 + $0x28] sm:$0xf]
  %v81 = vld [vmem:[%s3 + $0x2c] sm:$0xf]
  %v82 = vld [vmem:[%s3 + $0x30] sm:$0xf]
  %v83 = vld [vmem:[%s3 + $0x34] sm:$0xf]
  %v84 = vld [vmem:[%s3 + $0x38] sm:$0xf]
  %v85 = vld [vmem:[%s3 + $0x3c] sm:$0xf]
  %v86 = vld [vmem:[%s7] sm:$0xf]
  %v87 = vld [vmem:[%s7 + $0x4] sm:$0xf]
  %v88 = vld [vmem:[%s7 + $0x8] sm:$0xf]
  %v89 = vld [vmem:[%s7 + $0xc] sm:$0xf]
  %v90 = vld [vmem:[%s7 + $0x10] sm:$0xf]
  %v91 = vld [vmem:[%s7 + $0x14] sm:$0xf]
  %v92 = vld [vmem:[%s7 + $0x18] sm:$0xf]
  %v93 = vld [vmem:[%s7 + $0x1c] sm:$0xf]
  %v94 = vld [vmem:[%s7 + $0x20] sm:$0xf]
  %v95 = vld [vmem:[%s7 + $0x24] sm:$0xf]
  %v96 = vld [vmem:[%s7 + $0x28] sm:$0xf]
  %v97 = vld [vmem:[%s7 + $0x2c] sm:$0xf]
  %v98 = vld [vmem:[%s7 + $0x30] sm:$0xf]
  %v99 = vld [vmem:[%s7 + $0x34] sm:$0xf]
  %v100 = vld [vmem:[%s7 + $0x38] sm:$0xf]
  %v101 = vld [vmem:[%s7 + $0x3c] sm:$0xf]
  %v102 = vld [vmem:[%s4] sm:$0x1]
  %v103 = vld [vmem:[%s8] sm:$0x1]
  %v104 = vld [vmem:[%s5] sm:$0x1]
  %v105 = vld [vmem:[%s9] sm:$0x1]
  %v106 = vld [vmem:[%s0] sm:$0xf]
  %v107 = vld [vmem:[%s0 + $0x4] sm:$0xf]
  %v108 = vld [vmem:[%s0 + $0x8] sm:$0xf]
  %v109 = vld [vmem:[%s0 + $0xc] sm:$0xf]
  %v110 = vld [vmem:[%s0 + $0x10] sm:$0xf]
  %v111 = vld [vmem:[%s0 + $0x14] sm:$0xf]
  %v112 = vld [vmem:[%s0 + $0x18] sm:$0xf]
  %v113 = vld [vmem:[%s0 + $0x1c] sm:$0xf]
  %v115 = vlaneseq
  %v116 = vshrl.u32 %v115, 7
  %v117 = vsub.s32 0, %v116
  %v118 = vrot.slane %v102, %v117
  %v128 = vunpack.c.l.b16 %v106
  %v129 = vunpack.c.l.b16 %v107
  %v130 = vunpack.c.l.b16 %v108
  %v131 = vunpack.c.l.b16 %v109
  %v132 = vunpack.c.l.b16 %v110
  %v133 = vunpack.c.l.b16 %v111
  %v134 = vunpack.c.l.b16 %v112
  %v135 = vunpack.c.l.b16 %v113
  %v136 = vpack.c.b16 %v129, %v128
  %v137 = vpack.c.b16 %v131, %v130
  %v138 = vpack.c.b16 %v133, %v132
  %v139 = vpack.c.b16 %v135, %v134
  %v160 = vunpack.c.l.b16 %v38
  %v161 = vunpack.c.l.b16 %v39
  %v162 = vunpack.c.l.b16 %v40
  %v163 = vunpack.c.l.b16 %v41
  %v164 = vunpack.c.l.b16 %v42
  %v165 = vunpack.c.l.b16 %v43
  %v166 = vunpack.c.l.b16 %v44
  %v167 = vunpack.c.l.b16 %v45
  %v168 = vunpack.c.l.b16 %v46
  %v169 = vunpack.c.l.b16 %v47
  %v170 = vunpack.c.l.b16 %v48
  %v171 = vunpack.c.l.b16 %v49
  %v172 = vunpack.c.l.b16 %v50
  %v173 = vunpack.c.l.b16 %v51
  %v174 = vunpack.c.l.b16 %v52
  %v175 = vunpack.c.l.b16 %v53
  %v176 = vpack.c.b16 %v161, %v160
  %v177 = vpack.c.b16 %v163, %v162
  %v178 = vpack.c.b16 %v165, %v164
  %v179 = vpack.c.b16 %v167, %v166
  %v180 = vpack.c.b16 %v169, %v168
  %v181 = vpack.c.b16 %v171, %v170
  %v182 = vpack.c.b16 %v173, %v172
  %v183 = vpack.c.b16 %v175, %v174
  %192 = vmatprep.subr.bf16.mxu0 0
  %193 = vmatpush1.bf16.msra.mxu0 %v176
  %194 = vmatprep.subr.bf16.mxu0 0
  %195 = vmatpush1.bf16.msra.mxu0 %v177
  %196 = vmatprep.subr.bf16.mxu0 0
  %197 = vmatpush1.bf16.msra.mxu0 %v178
  %198 = vmatprep.subr.bf16.mxu0 0
  %199 = vmatpush1.bf16.msra.mxu0 %v179
  %200 = vmatprep.subr.bf16.mxu0 0
  %201 = vmatpush1.bf16.msra.mxu0 %v180
  %202 = vmatprep.subr.bf16.mxu0 0
  %203 = vmatpush1.bf16.msra.mxu0 %v181
  %204 = vmatprep.subr.bf16.mxu0 0
  %205 = vmatpush1.bf16.msra.mxu0 %v182
  %206 = vmatprep.subr.bf16.mxu0 0
  %207 = vmatpush1.bf16.msra.mxu0 %v183
  %208 = vmatprep.subr.bf16.mxu0 0
  %209 = vmatpush1.bf16.msra.mxu0 0
  %210 = vmatprep.subr.bf16.mxu0 0
  %211 = vmatpush1.bf16.msra.mxu0 0
  %212 = vmatprep.subr.bf16.mxu0 0
  %213 = vmatpush1.bf16.msra.mxu0 0
  %214 = vmatprep.subr.bf16.mxu0 0
  %215 = vmatpush1.bf16.msra.mxu0 0
  %216 = vmatprep.subr.bf16.mxu0 0
  %217 = vmatpush1.bf16.msra.mxu0 0
  %218 = vmatprep.subr.bf16.mxu0 0
  %219 = vmatpush1.bf16.msra.mxu0 0
  %220 = vmatprep.subr.bf16.mxu0 0
  %221 = vmatpush1.bf16.msra.mxu0 0
  %222 = vmatprep.subr.bf16.mxu0 0
  %223 = vmatpush1.bf16.msra.mxu0 0
  %224 = vmatprep.mubr.bf16.mxu0 0
  %225 = vmatmul.mubr.bf16.gmra.mrb[0].mxu0 %v136
  %v226 = vpop.f32.mrb[0].mxu0
  %v227 = vadd.f32 %v118, %v226
  %v228 = vpop.f32.mrb[0].mxu0
  %v229 = vpop.f32.mrb[0].mxu0
  %v230 = vadd.f32 %v118, %v229
  %v231 = vpop.f32.mrb[0].mxu0
  %232 = vmatprep.mubr.bf16.mxu0 0
  %233 = vmatmul.mubr.bf16.gmra.mrb[0].mxu0 %v137
  %v234 = vpop.f32.mrb[0].mxu0
  %v235 = vadd.f32 %v118, %v234
  %v236 = vpop.f32.mrb[0].mxu0
  %v237 = vpop.f32.mrb[0].mxu0
  %v238 = vadd.f32 %v118, %v237
  %v239 = vpop.f32.mrb[0].mxu0
  %240 = vmatprep.mubr.bf16.mxu0 0
  %241 = vmatmul.mubr.bf16.gmra.mrb[0].mxu0 %v138
  %v242 = vpop.f32.mrb[0].mxu0
  %v243 = vadd.f32 %v118, %v242
  %v244 = vpop.f32.mrb[0].mxu0
  %v245 = vpop.f32.mrb[0].mxu0
  %v246 = vadd.f32 %v118, %v245
  %v247 = vpop.f32.mrb[0].mxu0
  %248 = vmatprep.mubr.bf16.mxu0 0
  %249 = vmatmul.mubr.bf16.gmra.mrb[0].mxu0 %v139
  %v250 = vpop.f32.mrb[0].mxu0
  %v251 = vadd.f32 %v118, %v250
  %v252 = vpop.f32.mrb[0].mxu0
  %v253 = vpop.f32.mrb[0].mxu0
  %v254 = vadd.f32 %v118, %v253
  %v255 = vpop.f32.mrb[0].mxu0
  %256 = vdwg.mxu0
  %v257 = vld [vmem:[%s1] sm:$0xff]
  %s258 = scalar_lea.vmem %s1, 8
  %v259 = vld [vmem:[%s258] sm:$0xff]
  %v260 = vpack.c.bf16 %v257, %v257
  %v261 = vpack.c.bf16 %v259, %v259
  %v278 = vunpack.c.l.b16 %v70
  %v279 = vunpack.c.l.b16 %v71
  %v280 = vunpack.c.l.b16 %v72
  %v281 = vunpack.c.l.b16 %v73
  %v282 = vunpack.c.l.b16 %v74
  %v283 = vunpack.c.l.b16 %v75
  %v284 = vunpack.c.l.b16 %v76
  %v285 = vunpack.c.l.b16 %v77
  %v286 = vunpack.c.l.b16 %v78
  %v287 = vunpack.c.l.b16 %v79
  %v288 = vunpack.c.l.b16 %v80
  %v289 = vunpack.c.l.b16 %v81
  %v290 = vunpack.c.l.b16 %v82
  %v291 = vunpack.c.l.b16 %v83
  %v292 = vunpack.c.l.b16 %v84
  %v293 = vunpack.c.l.b16 %v85
  %v294 = vpack.c.b16 %v279, %v278
  %v295 = vpack.c.b16 %v281, %v280
  %v296 = vpack.c.b16 %v283, %v282
  %v297 = vpack.c.b16 %v285, %v284
  %v298 = vpack.c.b16 %v287, %v286
  %v299 = vpack.c.b16 %v289, %v288
  %v300 = vpack.c.b16 %v291, %v290
  %v301 = vpack.c.b16 %v293, %v292
  %310 = vmatprep.subr.bf16.mxu0 0
  %311 = vmatpush1.bf16.msra.mxu0 %v294
  %312 = vmatprep.subr.bf16.mxu0 0
  %313 = vmatpush1.bf16.msra.mxu0 %v295
  %314 = vmatprep.subr.bf16.mxu0 0
  %315 = vmatpush1.bf16.msra.mxu0 %v296
  %316 = vmatprep.subr.bf16.mxu0 0
  %317 = vmatpush1.bf16.msra.mxu0 %v297
  %318 = vmatprep.subr.bf16.mxu0 0
  %319 = vmatpush1.bf16.msra.mxu0 %v298
  %320 = vmatprep.subr.bf16.mxu0 0
  %321 = vmatpush1.bf16.msra.mxu0 %v299
  %322 = vmatprep.subr.bf16.mxu0 0
  %323 = vmatpush1.bf16.msra.mxu0 %v300
  %324 = vmatprep.subr.bf16.mxu0 0
  %325 = vmatpush1.bf16.msra.mxu0 %v301
  %326 = vmatprep.subr.bf16.mxu0 0
  %327 = vmatpush1.bf16.msra.mxu0 0
  %328 = vmatprep.subr.bf16.mxu0 0
  %329 = vmatpush1.bf16.msra.mxu0 0
  %330 = vmatprep.subr.bf16.mxu0 0
  %331 = vmatpush1.bf16.msra.mxu0 0
  %332 = vmatprep.subr.bf16.mxu0 0
  %333 = vmatpush1.bf16.msra.mxu0 0
  %334 = vmatprep.subr.bf16.mxu0 0
  %335 = vmatpush1.bf16.msra.mxu0 0
  %336 = vmatprep.subr.bf16.mxu0 0
  %337 = vmatpush1.bf16.msra.mxu0 0
  %338 = vmatprep.subr.bf16.mxu0 0
  %339 = vmatpush1.bf16.msra.mxu0 0
  %340 = vmatprep.subr.bf16.mxu0 0
  %341 = vmatpush1.bf16.msra.mxu0 0
  %342 = vmatprep.mubr.bf16.mxu0 0
  %343 = vmatmul.mubr.bf16.gmra.mrb[0].mxu0 %v260
  %v344 = vpop.f32.mrb[0].mxu0
  %v345 = vadd.f32 0.0, %v344
  %v346 = vpop.f32.mrb[0].mxu0
  %v347 = vpop.f32.mrb[0].mxu0
  %v348 = vpop.f32.mrb[0].mxu0
  %349 = vdwg.mxu0
  %v350 = vadd.f32 %v227, %v345
  %v351 = vxor.u32 %v350, 2147483648
  %v352 = vmul.f32 %v351, 1.442695
  %v353 = vpow.pop %v352
  %v354 = vadd.f32 %v353, 1.0
  %v355 = vrcp.pop %v354
  %v356 = vmul.f32 1.0, %v355
  %357 = vrot.lane.b32.xlu0 %v356, 64
  %v358 = vpop.permute.xlu0 %357
  %v360 = vlaneseq
  %v361 = vshrl.u32 %v360, 7
  %v362 = vsub.s32 0, %v361
  %v363 = vrot.slane %v104, %v362
  %v365 = vadd.f32 %v345, %v363
  %v366 = vmul.f32 %v358, %v365
  %v367 = vadd.f32 %v227, %v366
  %v368 = vtanh.pop %v367
  %369 = vrot.lane.b32.xlu0 %v356, 96
  %v370 = vpop.permute.xlu0 %369
  %371 = vrot.lane.b32.xlu0 %v368, 64
  %v372 = vpop.permute.xlu0 %371
  %v373 = vsub.f32 1.0, %v370
  %v374 = vmul.f32 %v373, %v372
  %v375 = vmul.f32 %v370, %v257
  %v376 = vadd.f32 %v374, %v375
  %v377 = vpack.c.bf16 %v376, %v376
  %378 = vmatprep.subr.bf16.mxu0 0
  %379 = vmatpush1.bf16.msra.mxu0 %v294
  %380 = vmatprep.subr.bf16.mxu0 0
  %381 = vmatpush1.bf16.msra.mxu0 %v295
  %382 = vmatprep.subr.bf16.mxu0 0
  %383 = vmatpush1.bf16.msra.mxu0 %v296
  %384 = vmatprep.subr.bf16.mxu0 0
  %385 = vmatpush1.bf16.msra.mxu0 %v297
  %386 = vmatprep.subr.bf16.mxu0 0
  %387 = vmatpush1.bf16.msra.mxu0 %v298
  %388 = vmatprep.subr.bf16.mxu0 0
  %389 = vmatpush1.bf16.msra.mxu0 %v299
  %390 = vmatprep.subr.bf16.mxu0 0
  %391 = vmatpush1.bf16.msra.mxu0 %v300
  %392 = vmatprep.subr.bf16.mxu0 0
  %393 = vmatpush1.bf16.msra.mxu0 %v301
  %394 = vmatprep.subr.bf16.mxu0 0
  %395 = vmatpush1.bf16.msra.mxu0 0
  %396 = vmatprep.subr.bf16.mxu0 0
  %397 = vmatpush1.bf16.msra.mxu0 0
  %398 = vmatprep.subr.bf16.mxu0 0
  %399 = vmatpush1.bf16.msra.mxu0 0
  %400 = vmatprep.subr.bf16.mxu0 0
  %401 = vmatpush1.bf16.msra.mxu0 0
  %402 = vmatprep.subr.bf16.mxu0 0
  %403 = vmatpush1.bf16.msra.mxu0 0
  %404 = vmatprep.subr.bf16.mxu0 0
  %405 = vmatpush1.bf16.msra.mxu0 0
  %406 = vmatprep.subr.bf16.mxu0 0
  %407 = vmatpush1.bf16.msra.mxu0 0
  %408 = vmatprep.subr.bf16.mxu0 0
  %409 = vmatpush1.bf16.msra.mxu0 0
  %410 = vmatprep.mubr.bf16.mxu0 0
  %411 = vmatmul.mubr.bf16.gmra.mrb[0].mxu0 %v377
  %v412 = vpop.f32.mrb[0].mxu0
  %v413 = vadd.f32 0.0, %v412
  %v414 = vpop.f32.mrb[0].mxu0
  %v415 = vpop.f32.mrb[0].mxu0
  %v416 = vpop.f32.mrb[0].mxu0
  %417 = vdwg.mxu0
  %v418 = vadd.f32 %v230, %v413
  %v419 = vxor.u32 %v418, 2147483648
  %v420 = vmul.f32 %v419, 1.442695
  %v421 = vpow.pop %v420
  %v422 = vadd.f32 %v421, 1.0
  %v423 = vrcp.pop %v422
  %v424 = vmul.f32 1.0, %v423
  %425 = vrot.lane.b32.xlu0 %v424, 64
  %v426 = vpop.permute.xlu0 %425
  %v427 = vadd.f32 %v413, %v363
  %v428 = vmul.f32 %v426, %v427
  %v429 = vadd.f32 %v230, %v428
  %v430 = vtanh.pop %v429
  %431 = vrot.lane.b32.xlu0 %v424, 96
  %v432 = vpop.permute.xlu0 %431
  %433 = vrot.lane.b32.xlu0 %v430, 64
  %v434 = vpop.permute.xlu0 %433
  %v435 = vsub.f32 1.0, %v432
  %v436 = vmul.f32 %v435, %v434
  %v437 = vmul.f32 %v432, %v376
  %v438 = vadd.f32 %v436, %v437
  %v439 = vpack.c.bf16 %v438, %v438
  %v441 = vlaneseq
  %v442 = vshrl.u32 %v441, 7
  %v443 = vsub.s32 0, %v442
  %v444 = vrot.slane %v103, %v443
  %v462 = vunpack.c.l.b16 %v54
  %v463 = vunpack.c.l.b16 %v55
  %v464 = vunpack.c.l.b16 %v56
  %v465 = vunpack.c.l.b16 %v57
  %v466 = vunpack.c.l.b16 %v58
  %v467 = vunpack.c.l.b16 %v59
  %v468 = vunpack.c.l.b16 %v60
  %v469 = vunpack.c.l.b16 %v61
  %v470 = vunpack.c.l.b16 %v62
  %v471 = vunpack.c.l.b16 %v63
  %v472 = vunpack.c.l.b16 %v64
  %v473 = vunpack.c.l.b16 %v65
  %v474 = vunpack.c.l.b16 %v66
  %v475 = vunpack.c.l.b16 %v67
  %v476 = vunpack.c.l.b16 %v68
  %v477 = vunpack.c.l.b16 %v69
  %v478 = vpack.c.b16 %v463, %v462
  %v479 = vpack.c.b16 %v465, %v464
  %v480 = vpack.c.b16 %v467, %v466
  %v481 = vpack.c.b16 %v469, %v468
  %v482 = vpack.c.b16 %v471, %v470
  %v483 = vpack.c.b16 %v473, %v472
  %v484 = vpack.c.b16 %v475, %v474
  %v485 = vpack.c.b16 %v477, %v476
  %494 = vmatprep.subr.bf16.mxu0 0
  %495 = vmatpush1.bf16.msra.mxu0 %v478
  %496 = vmatprep.subr.bf16.mxu0 0
  %497 = vmatpush1.bf16.msra.mxu0 %v479
  %498 = vmatprep.subr.bf16.mxu0 0
  %499 = vmatpush1.bf16.msra.mxu0 %v480
  %500 = vmatprep.subr.bf16.mxu0 0
  %501 = vmatpush1.bf16.msra.mxu0 %v481
  %502 = vmatprep.subr.bf16.mxu0 0
  %503 = vmatpush1.bf16.msra.mxu0 %v482
  %504 = vmatprep.subr.bf16.mxu0 0
  %505 = vmatpush1.bf16.msra.mxu0 %v483
  %506 = vmatprep.subr.bf16.mxu0 0
  %507 = vmatpush1.bf16.msra.mxu0 %v484
  %508 = vmatprep.subr.bf16.mxu0 0
  %509 = vmatpush1.bf16.msra.mxu0 %v485
  %510 = vmatprep.subr.bf16.mxu0 0
  %511 = vmatpush1.bf16.msra.mxu0 0
  %512 = vmatprep.subr.bf16.mxu0 0
  %513 = vmatpush1.bf16.msra.mxu0 0
  %514 = vmatprep.subr.bf16.mxu0 0
  %515 = vmatpush1.bf16.msra.mxu0 0
  %516 = vmatprep.subr.bf16.mxu0 0
  %517 = vmatpush1.bf16.msra.mxu0 0
  %518 = vmatprep.subr.bf16.mxu0 0
  %519 = vmatpush1.bf16.msra.mxu0 0
  %520 = vmatprep.subr.bf16.mxu0 0
  %521 = vmatpush1.bf16.msra.mxu0 0
  %522 = vmatprep.subr.bf16.mxu0 0
  %523 = vmatpush1.bf16.msra.mxu0 0
  %524 = vmatprep.subr.bf16.mxu0 0
  %525 = vmatpush1.bf16.msra.mxu0 0
  %526 = vmatprep.mubr.bf16.mxu0 0
  %527 = vmatmul.mubr.bf16.gmra.mrb[0].mxu0 %v377
  %v528 = vpop.f32.mrb[0].mxu0
  %v529 = vadd.f32 %v444, %v528
  %v530 = vpop.f32.mrb[0].mxu0
  %v531 = vpop.f32.mrb[0].mxu0
  %v532 = vpop.f32.mrb[0].mxu0
  %533 = vdwg.mxu0
  %v550 = vunpack.c.l.b16 %v86
  %v551 = vunpack.c.l.b16 %v87
  %v552 = vunpack.c.l.b16 %v88
  %v553 = vunpack.c.l.b16 %v89
  %v554 = vunpack.c.l.b16 %v90
  %v555 = vunpack.c.l.b16 %v91
  %v556 = vunpack.c.l.b16 %v92
  %v557 = vunpack.c.l.b16 %v93
  %v558 = vunpack.c.l.b16 %v94
  %v559 = vunpack.c.l.b16 %v95
  %v560 = vunpack.c.l.b16 %v96
  %v561 = vunpack.c.l.b16 %v97
  %v562 = vunpack.c.l.b16 %v98
  %v563 = vunpack.c.l.b16 %v99
  %v564 = vunpack.c.l.b16 %v100
  %v565 = vunpack.c.l.b16 %v101
  %v566 = vpack.c.b16 %v551, %v550
  %v567 = vpack.c.b16 %v553, %v552
  %v568 = vpack.c.b16 %v555, %v554
  %v569 = vpack.c.b16 %v557, %v556
  %v570 = vpack.c.b16 %v559, %v558
  %v571 = vpack.c.b16 %v561, %v560
  %v572 = vpack.c.b16 %v563, %v562
  %v573 = vpack.c.b16 %v565, %v564
  %582 = vmatprep.subr.bf16.mxu0 0
  %583 = vmatpush1.bf16.msra.mxu0 %v566
  %584 = vmatprep.subr.bf16.mxu0 0
  %585 = vmatpush1.bf16.msra.mxu0 %v567
  %586 = vmatprep.subr.bf16.mxu0 0
  %587 = vmatpush1.bf16.msra.mxu0 %v568
  %588 = vmatprep.subr.bf16.mxu0 0
  %589 = vmatpush1.bf16.msra.mxu0 %v569
  %590 = vmatprep.subr.bf16.mxu0 0
  %591 = vmatpush1.bf16.msra.mxu0 %v570
  %592 = vmatprep.subr.bf16.mxu0 0
  %593 = vmatpush1.bf16.msra.mxu0 %v571
  %594 = vmatprep.subr.bf16.mxu0 0
  %595 = vmatpush1.bf16.msra.mxu0 %v572
  %596 = vmatprep.subr.bf16.mxu0 0
  %597 = vmatpush1.bf16.msra.mxu0 %v573
  %598 = vmatprep.subr.bf16.mxu0 0
  %599 = vmatpush1.bf16.msra.mxu0 0
  %600 = vmatprep.subr.bf16.mxu0 0
  %601 = vmatpush1.bf16.msra.mxu0 0
  %602 = vmatprep.subr.bf16.mxu0 0
  %603 = vmatpush1.bf16.msra.mxu0 0
  %604 = vmatprep.subr.bf16.mxu0 0
  %605 = vmatpush1.bf16.msra.mxu0 0
  %606 = vmatprep.subr.bf16.mxu0 0
  %607 = vmatpush1.bf16.msra.mxu0 0
  %608 = vmatprep.subr.bf16.mxu0 0
  %609 = vmatpush1.bf16.msra.mxu0 0
  %610 = vmatprep.subr.bf16.mxu0 0
  %611 = vmatpush1.bf16.msra.mxu0 0
  %612 = vmatprep.subr.bf16.mxu0 0
  %613 = vmatpush1.bf16.msra.mxu0 0
  %614 = vmatprep.mubr.bf16.mxu0 0
  %615 = vmatmul.mubr.bf16.gmra.mrb[0].mxu0 %v261
  %v616 = vpop.f32.mrb[0].mxu0
  %v617 = vadd.f32 0.0, %v616
  %v618 = vpop.f32.mrb[0].mxu0
  %v619 = vpop.f32.mrb[0].mxu0
  %v620 = vpop.f32.mrb[0].mxu0
  %621 = vdwg.mxu0
  %v622 = vadd.f32 %v529, %v617
  %v623 = vxor.u32 %v622, 2147483648
  %v624 = vmul.f32 %v623, 1.442695
  %v625 = vpow.pop %v624
  %v626 = vadd.f32 %v625, 1.0
  %v627 = vrcp.pop %v626
  %v628 = vmul.f32 1.0, %v627
  %629 = vrot.lane.b32.xlu0 %v628, 64
  %v630 = vpop.permute.xlu0 %629
  %v632 = vlaneseq
  %v633 = vshrl.u32 %v632, 7
  %v634 = vsub.s32 0, %v633
  %v635 = vrot.slane %v105, %v634
  %v637 = vadd.f32 %v617, %v635
  %v638 = vmul.f32 %v630, %v637
  %v639 = vadd.f32 %v529, %v638
  %v640 = vtanh.pop %v639
  %641 = vrot.lane.b32.xlu0 %v628, 96
  %v642 = vpop.permute.xlu0 %641
  %643 = vrot.lane.b32.xlu0 %v640, 64
  %v644 = vpop.permute.xlu0 %643
  %v645 = vsub.f32 1.0, %v642
  %v646 = vmul.f32 %v645, %v644
  %v647 = vmul.f32 %v642, %v259
  %v648 = vadd.f32 %v646, %v647
  %v649 = vpack.c.bf16 %v648, %v648
  %650 = vst [vmem:[%s10] sm:$0xff] %v648
  %651 = vmatprep.subr.bf16.mxu0 0
  %652 = vmatpush1.bf16.msra.mxu0 %v294
  %653 = vmatprep.subr.bf16.mxu0 0
  %654 = vmatpush1.bf16.msra.mxu0 %v295
  %655 = vmatprep.subr.bf16.mxu0 0
  %656 = vmatpush1.bf16.msra.mxu0 %v296
  %657 = vmatprep.subr.bf16.mxu0 0
  %658 = vmatpush1.bf16.msra.mxu0 %v297
  %659 = vmatprep.subr.bf16.mxu0 0
  %660 = vmatpush1.bf16.msra.mxu0 %v298
  %661 = vmatprep.subr.bf16.mxu0 0
  %662 = vmatpush1.bf16.msra.mxu0 %v299
  %663 = vmatprep.subr.bf16.mxu0 0
  %664 = vmatpush1.bf16.msra.mxu0 %v300
  %665 = vmatprep.subr.bf16.mxu0 0
  %666 = vmatpush1.bf16.msra.mxu0 %v301
  %667 = vmatprep.subr.bf16.mxu0 0
  %668 = vmatpush1.bf16.msra.mxu0 0
  %669 = vmatprep.subr.bf16.mxu0 0
  %670 = vmatpush1.bf16.msra.mxu0 0
  %671 = vmatprep.subr.bf16.mxu0 0
  %672 = vmatpush1.bf16.msra.mxu0 0
  %673 = vmatprep.subr.bf16.mxu0 0
  %674 = vmatpush1.bf16.msra.mxu0 0
  %675 = vmatprep.subr.bf16.mxu0 0
  %676 = vmatpush1.bf16.msra.mxu0 0
  %677 = vmatprep.subr.bf16.mxu0 0
  %678 = vmatpush1.bf16.msra.mxu0 0
  %679 = vmatprep.subr.bf16.mxu0 0
  %680 = vmatpush1.bf16.msra.mxu0 0
  %681 = vmatprep.subr.bf16.mxu0 0
  %682 = vmatpush1.bf16.msra.mxu0 0
  %683 = vmatprep.mubr.bf16.mxu0 0
  %684 = vmatmul.mubr.bf16.gmra.mrb[0].mxu0 %v439
  %v685 = vpop.f32.mrb[0].mxu0
  %v686 = vadd.f32 0.0, %v685
  %v687 = vpop.f32.mrb[0].mxu0
  %v688 = vpop.f32.mrb[0].mxu0
  %v689 = vpop.f32.mrb[0].mxu0
  %690 = vdwg.mxu0
  %v691 = vadd.f32 %v235, %v686
  %v692 = vxor.u32 %v691, 2147483648
  %v693 = vmul.f32 %v692, 1.442695
  %v694 = vpow.pop %v693
  %v695 = vadd.f32 %v694, 1.0
  %v696 = vrcp.pop %v695
  %v697 = vmul.f32 1.0, %v696
  %698 = vrot.lane.b32.xlu0 %v697, 64
  %v699 = vpop.permute.xlu0 %698
  %v700 = vadd.f32 %v686, %v363
  %v701 = vmul.f32 %v699, %v700
  %v702 = vadd.f32 %v235, %v701
  %v703 = vtanh.pop %v702
  %704 = vrot.lane.b32.xlu0 %v697, 96
  %v705 = vpop.permute.xlu0 %704
  %706 = vrot.lane.b32.xlu0 %v703, 64
  %v707 = vpop.permute.xlu0 %706
  %v708 = vsub.f32 1.0, %v705
  %v709 = vmul.f32 %v708, %v707
  %v710 = vmul.f32 %v705, %v438
  %v711 = vadd.f32 %v709, %v710
  %v712 = vpack.c.bf16 %v711, %v711
  %713 = vmatprep.subr.bf16.mxu0 0
  %714 = vmatpush1.bf16.msra.mxu0 %v478
  %715 = vmatprep.subr.bf16.mxu0 0
  %716 = vmatpush1.bf16.msra.mxu0 %v479
  %717 = vmatprep.subr.bf16.mxu0 0
  %718 = vmatpush1.bf16.msra.mxu0 %v480
  %719 = vmatprep.subr.bf16.mxu0 0
  %720 = vmatpush1.bf16.msra.mxu0 %v481
  %721 = vmatprep.subr.bf16.mxu0 0
  %722 = vmatpush1.bf16.msra.mxu0 %v482
  %723 = vmatprep.subr.bf16.mxu0 0
  %724 = vmatpush1.bf16.msra.mxu0 %v483
  %725 = vmatprep.subr.bf16.mxu0 0
  %726 = vmatpush1.bf16.msra.mxu0 %v484
  %727 = vmatprep.subr.bf16.mxu0 0
  %728 = vmatpush1.bf16.msra.mxu0 %v485
  %729 = vmatprep.subr.bf16.mxu0 0
  %730 = vmatpush1.bf16.msra.mxu0 0
  %731 = vmatprep.subr.bf16.mxu0 0
  %732 = vmatpush1.bf16.msra.mxu0 0
  %733 = vmatprep.subr.bf16.mxu0 0
  %734 = vmatpush1.bf16.msra.mxu0 0
  %735 = vmatprep.subr.bf16.mxu0 0
  %736 = vmatpush1.bf16.msra.mxu0 0
  %737 = vmatprep.subr.bf16.mxu0 0
  %738 = vmatpush1.bf16.msra.mxu0 0
  %739 = vmatprep.subr.bf16.mxu0 0
  %740 = vmatpush1.bf16.msra.mxu0 0
  %741 = vmatprep.subr.bf16.mxu0 0
  %742 = vmatpush1.bf16.msra.mxu0 0
  %743 = vmatprep.subr.bf16.mxu0 0
  %744 = vmatpush1.bf16.msra.mxu0 0
  %745 = vmatprep.mubr.bf16.mxu0 0
  %746 = vmatmul.mubr.bf16.gmra.mrb[0].mxu0 %v439
  %v747 = vpop.f32.mrb[0].mxu0
  %v748 = vadd.f32 %v444, %v747
  %v749 = vpop.f32.mrb[0].mxu0
  %v750 = vpop.f32.mrb[0].mxu0
  %v751 = vpop.f32.mrb[0].mxu0
  %752 = vdwg.mxu0
  %753 = vmatprep.subr.bf16.mxu0 0
  %754 = vmatpush1.bf16.msra.mxu0 %v566
  %755 = vmatprep.subr.bf16.mxu0 0
  %756 = vmatpush1.bf16.msra.mxu0 %v567
  %757 = vmatprep.subr.bf16.mxu0 0
  %758 = vmatpush1.bf16.msra.mxu0 %v568
  %759 = vmatprep.subr.bf16.mxu0 0
  %760 = vmatpush1.bf16.msra.mxu0 %v569
  %761 = vmatprep.subr.bf16.mxu0 0
  %762 = vmatpush1.bf16.msra.mxu0 %v570
  %763 = vmatprep.subr.bf16.mxu0 0
  %764 = vmatpush1.bf16.msra.mxu0 %v571
  %765 = vmatprep.subr.bf16.mxu0 0
  %766 = vmatpush1.bf16.msra.mxu0 %v572
  %767 = vmatprep.subr.bf16.mxu0 0
  %768 = vmatpush1.bf16.msra.mxu0 %v573
  %769 = vmatprep.subr.bf16.mxu0 0
  %770 = vmatpush1.bf16.msra.mxu0 0
  %771 = vmatprep.subr.bf16.mxu0 0
  %772 = vmatpush1.bf16.msra.mxu0 0
  %773 = vmatprep.subr.bf16.mxu0 0
  %774 = vmatpush1.bf16.msra.mxu0 0
  %775 = vmatprep.subr.bf16.mxu0 0
  %776 = vmatpush1.bf16.msra.mxu0 0
  %777 = vmatprep.subr.bf16.mxu0 0
  %778 = vmatpush1.bf16.msra.mxu0 0
  %779 = vmatprep.subr.bf16.mxu0 0
  %780 = vmatpush1.bf16.msra.mxu0 0
  %781 = vmatprep.subr.bf16.mxu0 0
  %782 = vmatpush1.bf16.msra.mxu0 0
  %783 = vmatprep.subr.bf16.mxu0 0
  %784 = vmatpush1.bf16.msra.mxu0 0
  %785 = vmatprep.mubr.bf16.mxu0 0
  %786 = vmatmul.mubr.bf16.gmra.mrb[0].mxu0 %v649
  %v787 = vpop.f32.mrb[0].mxu0
  %v788 = vadd.f32 0.0, %v787
  %v789 = vpop.f32.mrb[0].mxu0
  %v790 = vpop.f32.mrb[0].mxu0
  %v791 = vpop.f32.mrb[0].mxu0
  %792 = vdwg.mxu0
  %v793 = vadd.f32 %v748, %v788
  %v794 = vxor.u32 %v793, 2147483648
  %v795 = vmul.f32 %v794, 1.442695
  %v796 = vpow.pop %v795
  %v797 = vadd.f32 %v796, 1.0
  %v798 = vrcp.pop %v797
  %v799 = vmul.f32 1.0, %v798
  %800 = vrot.lane.b32.xlu0 %v799, 64
  %v801 = vpop.permute.xlu0 %800
  %v802 = vadd.f32 %v788, %v635
  %v803 = vmul.f32 %v801, %v802
  %v804 = vadd.f32 %v748, %v803
  %v805 = vtanh.pop %v804
  %806 = vrot.lane.b32.xlu0 %v799, 96
  %v807 = vpop.permute.xlu0 %806
  %808 = vrot.lane.b32.xlu0 %v805, 64
  %v809 = vpop.permute.xlu0 %808
  %v810 = vsub.f32 1.0, %v807
  %v811 = vmul.f32 %v810, %v809
  %v812 = vmul.f32 %v807, %v648
  %v813 = vadd.f32 %v811, %v812
  %v814 = vpack.c.bf16 %v813, %v813
  %815 = vst [vmem:[%s10 + $0x8] sm:$0xff] %v813
  %816 = vmatprep.subr.bf16.mxu0 0
  %817 = vmatpush1.bf16.msra.mxu0 %v294
  %818 = vmatprep.subr.bf16.mxu0 0
  %819 = vmatpush1.bf16.msra.mxu0 %v295
  %820 = vmatprep.subr.bf16.mxu0 0
  %821 = vmatpush1.bf16.msra.mxu0 %v296
  %822 = vmatprep.subr.bf16.mxu0 0
  %823 = vmatpush1.bf16.msra.mxu0 %v297
  %824 = vmatprep.subr.bf16.mxu0 0
  %825 = vmatpush1.bf16.msra.mxu0 %v298
  %826 = vmatprep.subr.bf16.mxu0 0
  %827 = vmatpush1.bf16.msra.mxu0 %v299
  %828 = vmatprep.subr.bf16.mxu0 0
  %829 = vmatpush1.bf16.msra.mxu0 %v300
  %830 = vmatprep.subr.bf16.mxu0 0
  %831 = vmatpush1.bf16.msra.mxu0 %v301
  %832 = vmatprep.subr.bf16.mxu0 0
  %833 = vmatpush1.bf16.msra.mxu0 0
  %834 = vmatprep.subr.bf16.mxu0 0
  %835 = vmatpush1.bf16.msra.mxu0 0
  %836 = vmatprep.subr.bf16.mxu0 0
  %837 = vmatpush1.bf16.msra.mxu0 0
  %838 = vmatprep.subr.bf16.mxu0 0
  %839 = vmatpush1.bf16.msra.mxu0 0
  %840 = vmatprep.subr.bf16.mxu0 0
  %841 = vmatpush1.bf16.msra.mxu0 0
  %842 = vmatprep.subr.bf16.mxu0 0
  %843 = vmatpush1.bf16.msra.mxu0 0
  %844 = vmatprep.subr.bf16.mxu0 0
  %845 = vmatpush1.bf16.msra.mxu0 0
  %846 = vmatprep.subr.bf16.mxu0 0
  %847 = vmatpush1.bf16.msra.mxu0 0
  %848 = vmatprep.mubr.bf16.mxu0 0
  %849 = vmatmul.mubr.bf16.gmra.mrb[0].mxu0 %v712
  %v850 = vpop.f32.mrb[0].mxu0
  %v851 = vadd.f32 0.0, %v850
  %v852 = vpop.f32.mrb[0].mxu0
  %v853 = vpop.f32.mrb[0].mxu0
  %v854 = vpop.f32.mrb[0].mxu0
  %855 = vdwg.mxu0
  %v856 = vadd.f32 %v238, %v851
  %v857 = vxor.u32 %v856, 2147483648
  %v858 = vmul.f32 %v857, 1.442695
  %v859 = vpow.pop %v858
  %v860 = vadd.f32 %v859, 1.0
  %v861 = vrcp.pop %v860
  %v862 = vmul.f32 1.0, %v861
  %863 = vrot.lane.b32.xlu0 %v862, 64
  %v864 = vpop.permute.xlu0 %863
  %v865 = vadd.f32 %v851, %v363
  %v866 = vmul.f32 %v864, %v865
  %v867 = vadd.f32 %v238, %v866
  %v868 = vtanh.pop %v867
  %869 = vrot.lane.b32.xlu0 %v862, 96
  %v870 = vpop.permute.xlu0 %869
  %871 = vrot.lane.b32.xlu0 %v868, 64
  %v872 = vpop.permute.xlu0 %871
  %v873 = vsub.f32 1.0, %v870
  %v874 = vmul.f32 %v873, %v872
  %v875 = vmul.f32 %v870, %v711
  %v876 = vadd.f32 %v874, %v875
  %v877 = vpack.c.bf16 %v876, %v876
  %878 = vmatprep.subr.bf16.mxu0 0
  %879 = vmatpush1.bf16.msra.mxu0 %v478
  %880 = vmatprep.subr.bf16.mxu0 0
  %881 = vmatpush1.bf16.msra.mxu0 %v479
  %882 = vmatprep.subr.bf16.mxu0 0
  %883 = vmatpush1.bf16.msra.mxu0 %v480
  %884 = vmatprep.subr.bf16.mxu0 0
  %885 = vmatpush1.bf16.msra.mxu0 %v481
  %886 = vmatprep.subr.bf16.mxu0 0
  %887 = vmatpush1.bf16.msra.mxu0 %v482
  %888 = vmatprep.subr.bf16.mxu0 0
  %889 = vmatpush1.bf16.msra.mxu0 %v483
  %890 = vmatprep.subr.bf16.mxu0 0
  %891 = vmatpush1.bf16.msra.mxu0 %v484
  %892 = vmatprep.subr.bf16.mxu0 0
  %893 = vmatpush1.bf16.msra.mxu0 %v485
  %894 = vmatprep.subr.bf16.mxu0 0
  %895 = vmatpush1.bf16.msra.mxu0 0
  %896 = vmatprep.subr.bf16.mxu0 0
  %897 = vmatpush1.bf16.msra.mxu0 0
  %898 = vmatprep.subr.bf16.mxu0 0
  %899 = vmatpush1.bf16.msra.mxu0 0
  %900 = vmatprep.subr.bf16.mxu0 0
  %901 = vmatpush1.bf16.msra.mxu0 0
  %902 = vmatprep.subr.bf16.mxu0 0
  %903 = vmatpush1.bf16.msra.mxu0 0
  %904 = vmatprep.subr.bf16.mxu0 0
  %905 = vmatpush1.bf16.msra.mxu0 0
  %906 = vmatprep.subr.bf16.mxu0 0
  %907 = vmatpush1.bf16.msra.mxu0 0
  %908 = vmatprep.subr.bf16.mxu0 0
  %909 = vmatpush1.bf16.msra.mxu0 0
  %910 = vmatprep.mubr.bf16.mxu0 0
  %911 = vmatmul.mubr.bf16.gmra.mrb[0].mxu0 %v712
  %v912 = vpop.f32.mrb[0].mxu0
  %v913 = vadd.f32 %v444, %v912
  %v914 = vpop.f32.mrb[0].mxu0
  %v915 = vpop.f32.mrb[0].mxu0
  %v916 = vpop.f32.mrb[0].mxu0
  %917 = vdwg.mxu0
  %918 = vmatprep.subr.bf16.mxu0 0
  %919 = vmatpush1.bf16.msra.mxu0 %v566
  %920 = vmatprep.subr.bf16.mxu0 0
  %921 = vmatpush1.bf16.msra.mxu0 %v567
  %922 = vmatprep.subr.bf16.mxu0 0
  %923 = vmatpush1.bf16.msra.mxu0 %v568
  %924 = vmatprep.subr.bf16.mxu0 0
  %925 = vmatpush1.bf16.msra.mxu0 %v569
  %926 = vmatprep.subr.bf16.mxu0 0
  %927 = vmatpush1.bf16.msra.mxu0 %v570
  %928 = vmatprep.subr.bf16.mxu0 0
  %929 = vmatpush1.bf16.msra.mxu0 %v571
  %930 = vmatprep.subr.bf16.mxu0 0
  %931 = vmatpush1.bf16.msra.mxu0 %v572
  %932 = vmatprep.subr.bf16.mxu0 0
  %933 = vmatpush1.bf16.msra.mxu0 %v573
  %934 = vmatprep.subr.bf16.mxu0 0
  %935 = vmatpush1.bf16.msra.mxu0 0
  %936 = vmatprep.subr.bf16.mxu0 0
  %937 = vmatpush1.bf16.msra.mxu0 0
  %938 = vmatprep.subr.bf16.mxu0 0
  %939 = vmatpush1.bf16.msra.mxu0 0
  %940 = vmatprep.subr.bf16.mxu0 0
  %941 = vmatpush1.bf16.msra.mxu0 0
  %942 = vmatprep.subr.bf16.mxu0 0
  %943 = vmatpush1.bf16.msra.mxu0 0
  %944 = vmatprep.subr.bf16.mxu0 0
  %945 = vmatpush1.bf16.msra.mxu0 0
  %946 = vmatprep.subr.bf16.mxu0 0
  %947 = vmatpush1.bf16.msra.mxu0 0
  %948 = vmatprep.subr.bf16.mxu0 0
  %949 = vmatpush1.bf16.msra.mxu0 0
  %950 = vmatprep.mubr.bf16.mxu0 0
  %951 = vmatmul.mubr.bf16.gmra.mrb[0].mxu0 %v814
  %v952 = vpop.f32.mrb[0].mxu0
  %v953 = vadd.f32 0.0, %v952
  %v954 = vpop.f32.mrb[0].mxu0
  %v955 = vpop.f32.mrb[0].mxu0
  %v956 = vpop.f32.mrb[0].mxu0
  %957 = vdwg.mxu0
  %v958 = vadd.f32 %v913, %v953
  %v959 = vxor.u32 %v958, 2147483648
  %v960 = vmul.f32 %v959, 1.442695
  %v961 = vpow.pop %v960
  %v962 = vadd.f32 %v961, 1.0
  %v963 = vrcp.pop %v962
  %v964 = vmul.f32 1.0, %v963
  %965 = vrot.lane.b32.xlu0 %v964, 64
  %v966 = vpop.permute.xlu0 %965
  %v967 = vadd.f32 %v953, %v635
  %v968 = vmul.f32 %v966, %v967
  %v969 = vadd.f32 %v913, %v968
  %v970 = vtanh.pop %v969
  %971 = vrot.lane.b32.xlu0 %v964, 96
  %v972 = vpop.permute.xlu0 %971
  %973 = vrot.lane.b32.xlu0 %v970, 64
  %v974 = vpop.permute.xlu0 %973
  %v975 = vsub.f32 1.0, %v972
  %v976 = vmul.f32 %v975, %v974
  %v977 = vmul.f32 %v972, %v813
  %v978 = vadd.f32 %v976, %v977
  %v979 = vpack.c.bf16 %v978, %v978
  %980 = vst [vmem:[%s10 + $0x10] sm:$0xff] %v978
  %981 = vmatprep.subr.bf16.mxu0 0
  %982 = vmatpush1.bf16.msra.mxu0 %v294
  %983 = vmatprep.subr.bf16.mxu0 0
  %984 = vmatpush1.bf16.msra.mxu0 %v295
  %985 = vmatprep.subr.bf16.mxu0 0
  %986 = vmatpush1.bf16.msra.mxu0 %v296
  %987 = vmatprep.subr.bf16.mxu0 0
  %988 = vmatpush1.bf16.msra.mxu0 %v297
  %989 = vmatprep.subr.bf16.mxu0 0
  %990 = vmatpush1.bf16.msra.mxu0 %v298
  %991 = vmatprep.subr.bf16.mxu0 0
  %992 = vmatpush1.bf16.msra.mxu0 %v299
  %993 = vmatprep.subr.bf16.mxu0 0
  %994 = vmatpush1.bf16.msra.mxu0 %v300
  %995 = vmatprep.subr.bf16.mxu0 0
  %996 = vmatpush1.bf16.msra.mxu0 %v301
  %997 = vmatprep.subr.bf16.mxu0 0
  %998 = vmatpush1.bf16.msra.mxu0 0
  %999 = vmatprep.subr.bf16.mxu0 0
  %1000 = vmatpush1.bf16.msra.mxu0 0
  %1001 = vmatprep.subr.bf16.mxu0 0
  %1002 = vmatpush1.bf16.msra.mxu0 0
  %1003 = vmatprep.subr.bf16.mxu0 0
  %1004 = vmatpush1.bf16.msra.mxu0 0
  %1005 = vmatprep.subr.bf16.mxu0 0
  %1006 = vmatpush1.bf16.msra.mxu0 0
  %1007 = vmatprep.subr.bf16.mxu0 0
  %1008 = vmatpush1.bf16.msra.mxu0 0
  %1009 = vmatprep.subr.bf16.mxu0 0
  %1010 = vmatpush1.bf16.msra.mxu0 0
  %1011 = vmatprep.subr.bf16.mxu0 0
  %1012 = vmatpush1.bf16.msra.mxu0 0
  %1013 = vmatprep.mubr.bf16.mxu0 0
  %1014 = vmatmul.mubr.bf16.gmra.mrb[0].mxu0 %v877
  %v1015 = vpop.f32.mrb[0].mxu0
  %v1016 = vadd.f32 0.0, %v1015
  %v1017 = vpop.f32.mrb[0].mxu0
  %v1018 = vpop.f32.mrb[0].mxu0
  %v1019 = vpop.f32.mrb[0].mxu0
  %1020 = vdwg.mxu0
  %v1021 = vadd.f32 %v243, %v1016
  %v1022 = vxor.u32 %v1021, 2147483648
  %v1023 = vmul.f32 %v1022, 1.442695
  %v1024 = vpow.pop %v1023
  %v1025 = vadd.f32 %v1024, 1.0
  %v1026 = vrcp.pop %v1025
  %v1027 = vmul.f32 1.0, %v1026
  %1028 = vrot.lane.b32.xlu0 %v1027, 64
  %v1029 = vpop.permute.xlu0 %1028
  %v1030 = vadd.f32 %v1016, %v363
  %v1031 = vmul.f32 %v1029, %v1030
  %v1032 = vadd.f32 %v243, %v1031
  %v1033 = vtanh.pop %v1032
  %1034 = vrot.lane.b32.xlu0 %v1027, 96
  %v1035 = vpop.permute.xlu0 %1034
  %1036 = vrot.lane.b32.xlu0 %v1033, 64
  %v1037 = vpop.permute.xlu0 %1036
  %v1038 = vsub.f32 1.0, %v1035
  %v1039 = vmul.f32 %v1038, %v1037
  %v1040 = vmul.f32 %v1035, %v876
  %v1041 = vadd.f32 %v1039, %v1040
  %v1042 = vpack.c.bf16 %v1041, %v1041
  %1043 = vmatprep.subr.bf16.mxu0 0
  %1044 = vmatpush1.bf16.msra.mxu0 %v478
  %1045 = vmatprep.subr.bf16.mxu0 0
  %1046 = vmatpush1.bf16.msra.mxu0 %v479
  %1047 = vmatprep.subr.bf16.mxu0 0
  %1048 = vmatpush1.bf16.msra.mxu0 %v480
  %1049 = vmatprep.subr.bf16.mxu0 0
  %1050 = vmatpush1.bf16.msra.mxu0 %v481
  %1051 = vmatprep.subr.bf16.mxu0 0
  %1052 = vmatpush1.bf16.msra.mxu0 %v482
  %1053 = vmatprep.subr.bf16.mxu0 0
  %1054 = vmatpush1.bf16.msra.mxu0 %v483
  %1055 = vmatprep.subr.bf16.mxu0 0
  %1056 = vmatpush1.bf16.msra.mxu0 %v484
  %1057 = vmatprep.subr.bf16.mxu0 0
  %1058 = vmatpush1.bf16.msra.mxu0 %v485
  %1059 = vmatprep.subr.bf16.mxu0 0
  %1060 = vmatpush1.bf16.msra.mxu0 0
  %1061 = vmatprep.subr.bf16.mxu0 0
  %1062 = vmatpush1.bf16.msra.mxu0 0
  %1063 = vmatprep.subr.bf16.mxu0 0
  %1064 = vmatpush1.bf16.msra.mxu0 0
  %1065 = vmatprep.subr.bf16.mxu0 0
  %1066 = vmatpush1.bf16.msra.mxu0 0
  %1067 = vmatprep.subr.bf16.mxu0 0
  %1068 = vmatpush1.bf16.msra.mxu0 0
  %1069 = vmatprep.subr.bf16.mxu0 0
  %1070 = vmatpush1.bf16.msra.mxu0 0
  %1071 = vmatprep.subr.bf16.mxu0 0
  %1072 = vmatpush1.bf16.msra.mxu0 0
  %1073 = vmatprep.subr.bf16.mxu0 0
  %1074 = vmatpush1.bf16.msra.mxu0 0
  %1075 = vmatprep.mubr.bf16.mxu0 0
  %1076 = vmatmul.mubr.bf16.gmra.mrb[0].mxu0 %v877
  %v1077 = vpop.f32.mrb[0].mxu0
  %v1078 = vadd.f32 %v444, %v1077
  %v1079 = vpop.f32.mrb[0].mxu0
  %v1080 = vpop.f32.mrb[0].mxu0
  %v1081 = vpop.f32.mrb[0].mxu0
  %1082 = vdwg.mxu0
  %1083 = vmatprep.subr.bf16.mxu0 0
  %1084 = vmatpush1.bf16.msra.mxu0 %v566
  %1085 = vmatprep.subr.bf16.mxu0 0
  %1086 = vmatpush1.bf16.msra.mxu0 %v567
  %1087 = vmatprep.subr.bf16.mxu0 0
  %1088 = vmatpush1.bf16.msra.mxu0 %v568
  %1089 = vmatprep.subr.bf16.mxu0 0
  %1090 = vmatpush1.bf16.msra.mxu0 %v569
  %1091 = vmatprep.subr.bf16.mxu0 0
  %1092 = vmatpush1.bf16.msra.mxu0 %v570
  %1093 = vmatprep.subr.bf16.mxu0 0
  %1094 = vmatpush1.bf16.msra.mxu0 %v571
  %1095 = vmatprep.subr.bf16.mxu0 0
  %1096 = vmatpush1.bf16.msra.mxu0 %v572
  %1097 = vmatprep.subr.bf16.mxu0 0
  %1098 = vmatpush1.bf16.msra.mxu0 %v573
  %1099 = vmatprep.subr.bf16.mxu0 0
  %1100 = vmatpush1.bf16.msra.mxu0 0
  %1101 = vmatprep.subr.bf16.mxu0 0
  %1102 = vmatpush1.bf16.msra.mxu0 0
  %1103 = vmatprep.subr.bf16.mxu0 0
  %1104 = vmatpush1.bf16.msra.mxu0 0
  %1105 = vmatprep.subr.bf16.mxu0 0
  %1106 = vmatpush1.bf16.msra.mxu0 0
  %1107 = vmatprep.subr.bf16.mxu0 0
  %1108 = vmatpush1.bf16.msra.mxu0 0
  %1109 = vmatprep.subr.bf16.mxu0 0
  %1110 = vmatpush1.bf16.msra.mxu0 0
  %1111 = vmatprep.subr.bf16.mxu0 0
  %1112 = vmatpush1.bf16.msra.mxu0 0
  %1113 = vmatprep.subr.bf16.mxu0 0
  %1114 = vmatpush1.bf16.msra.mxu0 0
  %1115 = vmatprep.mubr.bf16.mxu0 0
  %1116 = vmatmul.mubr.bf16.gmra.mrb[0].mxu0 %v979
  %v1117 = vpop.f32.mrb[0].mxu0
  %v1118 = vadd.f32 0.0, %v1117
  %v1119 = vpop.f32.mrb[0].mxu0
  %v1120 = vpop.f32.mrb[0].mxu0
  %v1121 = vpop.f32.mrb[0].mxu0
  %1122 = vdwg.mxu0
  %v1123 = vadd.f32 %v1078, %v1118
  %v1124 = vxor.u32 %v1123, 2147483648
  %v1125 = vmul.f32 %v1124, 1.442695
  %v1126 = vpow.pop %v1125
  %v1127 = vadd.f32 %v1126, 1.0
  %v1128 = vrcp.pop %v1127
  %v1129 = vmul.f32 1.0, %v1128
  %1130 = vrot.lane.b32.xlu0 %v1129, 64
  %v1131 = vpop.permute.xlu0 %1130
  %v1132 = vadd.f32 %v1118, %v635
  %v1133 = vmul.f32 %v1131, %v1132
  %v1134 = vadd.f32 %v1078, %v1133
  %v1135 = vtanh.pop %v1134
  %1136 = vrot.lane.b32.xlu0 %v1129, 96
  %v1137 = vpop.permute.xlu0 %1136
  %1138 = vrot.lane.b32.xlu0 %v1135, 64
  %v1139 = vpop.permute.xlu0 %1138
  %v1140 = vsub.f32 1.0, %v1137
  %v1141 = vmul.f32 %v1140, %v1139
  %v1142 = vmul.f32 %v1137, %v978
  %v1143 = vadd.f32 %v1141, %v1142
  %v1144 = vpack.c.bf16 %v1143, %v1143
  %1145 = vst [vmem:[%s10 + $0x18] sm:$0xff] %v1143
  %1146 = vmatprep.subr.bf16.mxu0 0
  %1147 = vmatpush1.bf16.msra.mxu0 %v294
  %1148 = vmatprep.subr.bf16.mxu0 0
  %1149 = vmatpush1.bf16.msra.mxu0 %v295
  %1150 = vmatprep.subr.bf16.mxu0 0
  %1151 = vmatpush1.bf16.msra.mxu0 %v296
  %1152 = vmatprep.subr.bf16.mxu0 0
  %1153 = vmatpush1.bf16.msra.mxu0 %v297
  %1154 = vmatprep.subr.bf16.mxu0 0
  %1155 = vmatpush1.bf16.msra.mxu0 %v298
  %1156 = vmatprep.subr.bf16.mxu0 0
  %1157 = vmatpush1.bf16.msra.mxu0 %v299
  %1158 = vmatprep.subr.bf16.mxu0 0
  %1159 = vmatpush1.bf16.msra.mxu0 %v300
  %1160 = vmatprep.subr.bf16.mxu0 0
  %1161 = vmatpush1.bf16.msra.mxu0 %v301
  %1162 = vmatprep.subr.bf16.mxu0 0
  %1163 = vmatpush1.bf16.msra.mxu0 0
  %1164 = vmatprep.subr.bf16.mxu0 0
  %1165 = vmatpush1.bf16.msra.mxu0 0
  %1166 = vmatprep.subr.bf16.mxu0 0
  %1167 = vmatpush1.bf16.msra.mxu0 0
  %1168 = vmatprep.subr.bf16.mxu0 0
  %1169 = vmatpush1.bf16.msra.mxu0 0
  %1170 = vmatprep.subr.bf16.mxu0 0
  %1171 = vmatpush1.bf16.msra.mxu0 0
  %1172 = vmatprep.subr.bf16.mxu0 0
  %1173 = vmatpush1.bf16.msra.mxu0 0
  %1174 = vmatprep.subr.bf16.mxu0 0
  %1175 = vmatpush1.bf16.msra.mxu0 0
  %1176 = vmatprep.subr.bf16.mxu0 0
  %1177 = vmatpush1.bf16.msra.mxu0 0
  %1178 = vmatprep.mubr.bf16.mxu0 0
  %1179 = vmatmul.mubr.bf16.gmra.mrb[0].mxu0 %v1042
  %v1180 = vpop.f32.mrb[0].mxu0
  %v1181 = vadd.f32 0.0, %v1180
  %v1182 = vpop.f32.mrb[0].mxu0
  %v1183 = vpop.f32.mrb[0].mxu0
  %v1184 = vpop.f32.mrb[0].mxu0
  %1185 = vdwg.mxu0
  %v1186 = vadd.f32 %v246, %v1181
  %v1187 = vxor.u32 %v1186, 2147483648
  %v1188 = vmul.f32 %v1187, 1.442695
  %v1189 = vpow.pop %v1188
  %v1190 = vadd.f32 %v1189, 1.0
  %v1191 = vrcp.pop %v1190
  %v1192 = vmul.f32 1.0, %v1191
  %1193 = vrot.lane.b32.xlu0 %v1192, 64
  %v1194 = vpop.permute.xlu0 %1193
  %v1195 = vadd.f32 %v1181, %v363
  %v1196 = vmul.f32 %v1194, %v1195
  %v1197 = vadd.f32 %v246, %v1196
  %v1198 = vtanh.pop %v1197
  %1199 = vrot.lane.b32.xlu0 %v1192, 96
  %v1200 = vpop.permute.xlu0 %1199
  %1201 = vrot.lane.b32.xlu0 %v1198, 64
  %v1202 = vpop.permute.xlu0 %1201
  %v1203 = vsub.f32 1.0, %v1200
  %v1204 = vmul.f32 %v1203, %v1202
  %v1205 = vmul.f32 %v1200, %v1041
  %v1206 = vadd.f32 %v1204, %v1205
  %v1207 = vpack.c.bf16 %v1206, %v1206
  %1208 = vmatprep.subr.bf16.mxu0 0
  %1209 = vmatpush1.bf16.msra.mxu0 %v478
  %1210 = vmatprep.subr.bf16.mxu0 0
  %1211 = vmatpush1.bf16.msra.mxu0 %v479
  %1212 = vmatprep.subr.bf16.mxu0 0
  %1213 = vmatpush1.bf16.msra.mxu0 %v480
  %1214 = vmatprep.subr.bf16.mxu0 0
  %1215 = vmatpush1.bf16.msra.mxu0 %v481
  %1216 = vmatprep.subr.bf16.mxu0 0
  %1217 = vmatpush1.bf16.msra.mxu0 %v482
  %1218 = vmatprep.subr.bf16.mxu0 0
  %1219 = vmatpush1.bf16.msra.mxu0 %v483
  %1220 = vmatprep.subr.bf16.mxu0 0
  %1221 = vmatpush1.bf16.msra.mxu0 %v484
  %1222 = vmatprep.subr.bf16.mxu0 0
  %1223 = vmatpush1.bf16.msra.mxu0 %v485
  %1224 = vmatprep.subr.bf16.mxu0 0
  %1225 = vmatpush1.bf16.msra.mxu0 0
  %1226 = vmatprep.subr.bf16.mxu0 0
  %1227 = vmatpush1.bf16.msra.mxu0 0
  %1228 = vmatprep.subr.bf16.mxu0 0
  %1229 = vmatpush1.bf16.msra.mxu0 0
  %1230 = vmatprep.subr.bf16.mxu0 0
  %1231 = vmatpush1.bf16.msra.mxu0 0
  %1232 = vmatprep.subr.bf16.mxu0 0
  %1233 = vmatpush1.bf16.msra.mxu0 0
  %1234 = vmatprep.subr.bf16.mxu0 0
  %1235 = vmatpush1.bf16.msra.mxu0 0
  %1236 = vmatprep.subr.bf16.mxu0 0
  %1237 = vmatpush1.bf16.msra.mxu0 0
  %1238 = vmatprep.subr.bf16.mxu0 0
  %1239 = vmatpush1.bf16.msra.mxu0 0
  %1240 = vmatprep.mubr.bf16.mxu0 0
  %1241 = vmatmul.mubr.bf16.gmra.mrb[0].mxu0 %v1042
  %v1242 = vpop.f32.mrb[0].mxu0
  %v1243 = vadd.f32 %v444, %v1242
  %v1244 = vpop.f32.mrb[0].mxu0
  %v1245 = vpop.f32.mrb[0].mxu0
  %v1246 = vpop.f32.mrb[0].mxu0
  %1247 = vdwg.mxu0
  %1248 = vmatprep.subr.bf16.mxu0 0
  %1249 = vmatpush1.bf16.msra.mxu0 %v566
  %1250 = vmatprep.subr.bf16.mxu0 0
  %1251 = vmatpush1.bf16.msra.mxu0 %v567
  %1252 = vmatprep.subr.bf16.mxu0 0
  %1253 = vmatpush1.bf16.msra.mxu0 %v568
  %1254 = vmatprep.subr.bf16.mxu0 0
  %1255 = vmatpush1.bf16.msra.mxu0 %v569
  %1256 = vmatprep.subr.bf16.mxu0 0
  %1257 = vmatpush1.bf16.msra.mxu0 %v570
  %1258 = vmatprep.subr.bf16.mxu0 0
  %1259 = vmatpush1.bf16.msra.mxu0 %v571
  %1260 = vmatprep.subr.bf16.mxu0 0
  %1261 = vmatpush1.bf16.msra.mxu0 %v572
  %1262 = vmatprep.subr.bf16.mxu0 0
  %1263 = vmatpush1.bf16.msra.mxu0 %v573
  %1264 = vmatprep.subr.bf16.mxu0 0
  %1265 = vmatpush1.bf16.msra.mxu0 0
  %1266 = vmatprep.subr.bf16.mxu0 0
  %1267 = vmatpush1.bf16.msra.mxu0 0
  %1268 = vmatprep.subr.bf16.mxu0 0
  %1269 = vmatpush1.bf16.msra.mxu0 0
  %1270 = vmatprep.subr.bf16.mxu0 0
  %1271 = vmatpush1.bf16.msra.mxu0 0
  %1272 = vmatprep.subr.bf16.mxu0 0
  %1273 = vmatpush1.bf16.msra.mxu0 0
  %1274 = vmatprep.subr.bf16.mxu0 0
  %1275 = vmatpush1.bf16.msra.mxu0 0
  %1276 = vmatprep.subr.bf16.mxu0 0
  %1277 = vmatpush1.bf16.msra.mxu0 0
  %1278 = vmatprep.subr.bf16.mxu0 0
  %1279 = vmatpush1.bf16.msra.mxu0 0
  %1280 = vmatprep.mubr.bf16.mxu0 0
  %1281 = vmatmul.mubr.bf16.gmra.mrb[0].mxu0 %v1144
  %v1282 = vpop.f32.mrb[0].mxu0
  %v1283 = vadd.f32 0.0, %v1282
  %v1284 = vpop.f32.mrb[0].mxu0
  %v1285 = vpop.f32.mrb[0].mxu0
  %v1286 = vpop.f32.mrb[0].mxu0
  %1287 = vdwg.mxu0
  %v1288 = vadd.f32 %v1243, %v1283
  %v1289 = vxor.u32 %v1288, 2147483648
  %v1290 = vmul.f32 %v1289, 1.442695
  %v1291 = vpow.pop %v1290
  %v1292 = vadd.f32 %v1291, 1.0
  %v1293 = vrcp.pop %v1292
  %v1294 = vmul.f32 1.0, %v1293
  %1295 = vrot.lane.b32.xlu0 %v1294, 64
  %v1296 = vpop.permute.xlu0 %1295
  %v1297 = vadd.f32 %v1283, %v635
  %v1298 = vmul.f32 %v1296, %v1297
  %v1299 = vadd.f32 %v1243, %v1298
  %v1300 = vtanh.pop %v1299
  %1301 = vrot.lane.b32.xlu0 %v1294, 96
  %v1302 = vpop.permute.xlu0 %1301
  %1303 = vrot.lane.b32.xlu0 %v1300, 64
  %v1304 = vpop.permute.xlu0 %1303
  %v1305 = vsub.f32 1.0, %v1302
  %v1306 = vmul.f32 %v1305, %v1304
  %v1307 = vmul.f32 %v1302, %v1143
  %v1308 = vadd.f32 %v1306, %v1307
  %v1309 = vpack.c.bf16 %v1308, %v1308
  %1310 = vst [vmem:[%s10 + $0x20] sm:$0xff] %v1308
  %1311 = vmatprep.subr.bf16.mxu0 0
  %1312 = vmatpush1.bf16.msra.mxu0 %v294
  %1313 = vmatprep.subr.bf16.mxu0 0
  %1314 = vmatpush1.bf16.msra.mxu0 %v295
  %1315 = vmatprep.subr.bf16.mxu0 0
  %1316 = vmatpush1.bf16.msra.mxu0 %v296
  %1317 = vmatprep.subr.bf16.mxu0 0
  %1318 = vmatpush1.bf16.msra.mxu0 %v297
  %1319 = vmatprep.subr.bf16.mxu0 0
  %1320 = vmatpush1.bf16.msra.mxu0 %v298
  %1321 = vmatprep.subr.bf16.mxu0 0
  %1322 = vmatpush1.bf16.msra.mxu0 %v299
  %1323 = vmatprep.subr.bf16.mxu0 0
  %1324 = vmatpush1.bf16.msra.mxu0 %v300
  %1325 = vmatprep.subr.bf16.mxu0 0
  %1326 = vmatpush1.bf16.msra.mxu0 %v301
  %1327 = vmatprep.subr.bf16.mxu0 0
  %1328 = vmatpush1.bf16.msra.mxu0 0
  %1329 = vmatprep.subr.bf16.mxu0 0
  %1330 = vmatpush1.bf16.msra.mxu0 0
  %1331 = vmatprep.subr.bf16.mxu0 0
  %1332 = vmatpush1.bf16.msra.mxu0 0
  %1333 = vmatprep.subr.bf16.mxu0 0
  %1334 = vmatpush1.bf16.msra.mxu0 0
  %1335 = vmatprep.subr.bf16.mxu0 0
  %1336 = vmatpush1.bf16.msra.mxu0 0
  %1337 = vmatprep.subr.bf16.mxu0 0
  %1338 = vmatpush1.bf16.msra.mxu0 0
  %1339 = vmatprep.subr.bf16.mxu0 0
  %1340 = vmatpush1.bf16.msra.mxu0 0
  %1341 = vmatprep.subr.bf16.mxu0 0
  %1342 = vmatpush1.bf16.msra.mxu0 0
  %1343 = vmatprep.mubr.bf16.mxu0 0
  %1344 = vmatmul.mubr.bf16.gmra.mrb[0].mxu0 %v1207
  %v1345 = vpop.f32.mrb[0].mxu0
  %v1346 = vadd.f32 0.0, %v1345
  %v1347 = vpop.f32.mrb[0].mxu0
  %v1348 = vpop.f32.mrb[0].mxu0
  %v1349 = vpop.f32.mrb[0].mxu0
  %1350 = vdwg.mxu0
  %v1351 = vadd.f32 %v251, %v1346
  %v1352 = vxor.u32 %v1351, 2147483648
  %v1353 = vmul.f32 %v1352, 1.442695
  %v1354 = vpow.pop %v1353
  %v1355 = vadd.f32 %v1354, 1.0
  %v1356 = vrcp.pop %v1355
  %v1357 = vmul.f32 1.0, %v1356
  %1358 = vrot.lane.b32.xlu0 %v1357, 64
  %v1359 = vpop.permute.xlu0 %1358
  %v1360 = vadd.f32 %v1346, %v363
  %v1361 = vmul.f32 %v1359, %v1360
  %v1362 = vadd.f32 %v251, %v1361
  %v1363 = vtanh.pop %v1362
  %1364 = vrot.lane.b32.xlu0 %v1357, 96
  %v1365 = vpop.permute.xlu0 %1364
  %1366 = vrot.lane.b32.xlu0 %v1363, 64
  %v1367 = vpop.permute.xlu0 %1366
  %v1368 = vsub.f32 1.0, %v1365
  %v1369 = vmul.f32 %v1368, %v1367
  %v1370 = vmul.f32 %v1365, %v1206
  %v1371 = vadd.f32 %v1369, %v1370
  %v1372 = vpack.c.bf16 %v1371, %v1371
  %1373 = vmatprep.subr.bf16.mxu0 0
  %1374 = vmatpush1.bf16.msra.mxu0 %v478
  %1375 = vmatprep.subr.bf16.mxu0 0
  %1376 = vmatpush1.bf16.msra.mxu0 %v479
  %1377 = vmatprep.subr.bf16.mxu0 0
  %1378 = vmatpush1.bf16.msra.mxu0 %v480
  %1379 = vmatprep.subr.bf16.mxu0 0
  %1380 = vmatpush1.bf16.msra.mxu0 %v481
  %1381 = vmatprep.subr.bf16.mxu0 0
  %1382 = vmatpush1.bf16.msra.mxu0 %v482
  %1383 = vmatprep.subr.bf16.mxu0 0
  %1384 = vmatpush1.bf16.msra.mxu0 %v483
  %1385 = vmatprep.subr.bf16.mxu0 0
  %1386 = vmatpush1.bf16.msra.mxu0 %v484
  %1387 = vmatprep.subr.bf16.mxu0 0
  %1388 = vmatpush1.bf16.msra.mxu0 %v485
  %1389 = vmatprep.subr.bf16.mxu0 0
  %1390 = vmatpush1.bf16.msra.mxu0 0
  %1391 = vmatprep.subr.bf16.mxu0 0
  %1392 = vmatpush1.bf16.msra.mxu0 0
  %1393 = vmatprep.subr.bf16.mxu0 0
  %1394 = vmatpush1.bf16.msra.mxu0 0
  %1395 = vmatprep.subr.bf16.mxu0 0
  %1396 = vmatpush1.bf16.msra.mxu0 0
  %1397 = vmatprep.subr.bf16.mxu0 0
  %1398 = vmatpush1.bf16.msra.mxu0 0
  %1399 = vmatprep.subr.bf16.mxu0 0
  %1400 = vmatpush1.bf16.msra.mxu0 0
  %1401 = vmatprep.subr.bf16.mxu0 0
  %1402 = vmatpush1.bf16.msra.mxu0 0
  %1403 = vmatprep.subr.bf16.mxu0 0
  %1404 = vmatpush1.bf16.msra.mxu0 0
  %1405 = vmatprep.mubr.bf16.mxu0 0
  %1406 = vmatmul.mubr.bf16.gmra.mrb[0].mxu0 %v1207
  %v1407 = vpop.f32.mrb[0].mxu0
  %v1408 = vadd.f32 %v444, %v1407
  %v1409 = vpop.f32.mrb[0].mxu0
  %v1410 = vpop.f32.mrb[0].mxu0
  %v1411 = vpop.f32.mrb[0].mxu0
  %1412 = vdwg.mxu0
  %1413 = vmatprep.subr.bf16.mxu0 0
  %1414 = vmatpush1.bf16.msra.mxu0 %v566
  %1415 = vmatprep.subr.bf16.mxu0 0
  %1416 = vmatpush1.bf16.msra.mxu0 %v567
  %1417 = vmatprep.subr.bf16.mxu0 0
  %1418 = vmatpush1.bf16.msra.mxu0 %v568
  %1419 = vmatprep.subr.bf16.mxu0 0
  %1420 = vmatpush1.bf16.msra.mxu0 %v569
  %1421 = vmatprep.subr.bf16.mxu0 0
  %1422 = vmatpush1.bf16.msra.mxu0 %v570
  %1423 = vmatprep.subr.bf16.mxu0 0
  %1424 = vmatpush1.bf16.msra.mxu0 %v571
  %1425 = vmatprep.subr.bf16.mxu0 0
  %1426 = vmatpush1.bf16.msra.mxu0 %v572
  %1427 = vmatprep.subr.bf16.mxu0 0
  %1428 = vmatpush1.bf16.msra.mxu0 %v573
  %1429 = vmatprep.subr.bf16.mxu0 0
  %1430 = vmatpush1.bf16.msra.mxu0 0
  %1431 = vmatprep.subr.bf16.mxu0 0
  %1432 = vmatpush1.bf16.msra.mxu0 0
  %1433 = vmatprep.subr.bf16.mxu0 0
  %1434 = vmatpush1.bf16.msra.mxu0 0
  %1435 = vmatprep.subr.bf16.mxu0 0
  %1436 = vmatpush1.bf16.msra.mxu0 0
  %1437 = vmatprep.subr.bf16.mxu0 0
  %1438 = vmatpush1.bf16.msra.mxu0 0
  %1439 = vmatprep.subr.bf16.mxu0 0
  %1440 = vmatpush1.bf16.msra.mxu0 0
  %1441 = vmatprep.subr.bf16.mxu0 0
  %1442 = vmatpush1.bf16.msra.mxu0 0
  %1443 = vmatprep.subr.bf16.mxu0 0
  %1444 = vmatpush1.bf16.msra.mxu0 0
  %1445 = vmatprep.mubr.bf16.mxu0 0
  %1446 = vmatmul.mubr.bf16.gmra.mrb[0].mxu0 %v1309
  %v1447 = vpop.f32.mrb[0].mxu0
  %v1448 = vadd.f32 0.0, %v1447
  %v1449 = vpop.f32.mrb[0].mxu0
  %v1450 = vpop.f32.mrb[0].mxu0
  %v1451 = vpop.f32.mrb[0].mxu0
  %1452 = vdwg.mxu0
  %v1453 = vadd.f32 %v1408, %v1448
  %v1454 = vxor.u32 %v1453, 2147483648
  %v1455 = vmul.f32 %v1454, 1.442695
  %v1456 = vpow.pop %v1455
  %v1457 = vadd.f32 %v1456, 1.0
  %v1458 = vrcp.pop %v1457
  %v1459 = vmul.f32 1.0, %v1458
  %1460 = vrot.lane.b32.xlu0 %v1459, 64
  %v1461 = vpop.permute.xlu0 %1460
  %v1462 = vadd.f32 %v1448, %v635
  %v1463 = vmul.f32 %v1461, %v1462
  %v1464 = vadd.f32 %v1408, %v1463
  %v1465 = vtanh.pop %v1464
  %1466 = vrot.lane.b32.xlu0 %v1459, 96
  %v1467 = vpop.permute.xlu0 %1466
  %1468 = vrot.lane.b32.xlu0 %v1465, 64
  %v1469 = vpop.permute.xlu0 %1468
  %v1470 = vsub.f32 1.0, %v1467
  %v1471 = vmul.f32 %v1470, %v1469
  %v1472 = vmul.f32 %v1467, %v1308
  %v1473 = vadd.f32 %v1471, %v1472
  %v1474 = vpack.c.bf16 %v1473, %v1473
  %1475 = vst [vmem:[%s10 + $0x28] sm:$0xff] %v1473
  %1476 = vmatprep.subr.bf16.mxu0 0
  %1477 = vmatpush1.bf16.msra.mxu0 %v294
  %1478 = vmatprep.subr.bf16.mxu0 0
  %1479 = vmatpush1.bf16.msra.mxu0 %v295
  %1480 = vmatprep.subr.bf16.mxu0 0
  %1481 = vmatpush1.bf16.msra.mxu0 %v296
  %1482 = vmatprep.subr.bf16.mxu0 0
  %1483 = vmatpush1.bf16.msra.mxu0 %v297
  %1484 = vmatprep.subr.bf16.mxu0 0
  %1485 = vmatpush1.bf16.msra.mxu0 %v298
  %1486 = vmatprep.subr.bf16.mxu0 0
  %1487 = vmatpush1.bf16.msra.mxu0 %v299
  %1488 = vmatprep.subr.bf16.mxu0 0
  %1489 = vmatpush1.bf16.msra.mxu0 %v300
  %1490 = vmatprep.subr.bf16.mxu0 0
  %1491 = vmatpush1.bf16.msra.mxu0 %v301
  %1492 = vmatprep.subr.bf16.mxu0 0
  %1493 = vmatpush1.bf16.msra.mxu0 0
  %1494 = vmatprep.subr.bf16.mxu0 0
  %1495 = vmatpush1.bf16.msra.mxu0 0
  %1496 = vmatprep.subr.bf16.mxu0 0
  %1497 = vmatpush1.bf16.msra.mxu0 0
  %1498 = vmatprep.subr.bf16.mxu0 0
  %1499 = vmatpush1.bf16.msra.mxu0 0
  %1500 = vmatprep.subr.bf16.mxu0 0
  %1501 = vmatpush1.bf16.msra.mxu0 0
  %1502 = vmatprep.subr.bf16.mxu0 0
  %1503 = vmatpush1.bf16.msra.mxu0 0
  %1504 = vmatprep.subr.bf16.mxu0 0
  %1505 = vmatpush1.bf16.msra.mxu0 0
  %1506 = vmatprep.subr.bf16.mxu0 0
  %1507 = vmatpush1.bf16.msra.mxu0 0
  %1508 = vmatprep.mubr.bf16.mxu0 0
  %1509 = vmatmul.mubr.bf16.gmra.mrb[0].mxu0 %v1372
  %v1510 = vpop.f32.mrb[0].mxu0
  %v1511 = vadd.f32 0.0, %v1510
  %v1512 = vpop.f32.mrb[0].mxu0
  %v1513 = vpop.f32.mrb[0].mxu0
  %v1514 = vpop.f32.mrb[0].mxu0
  %1515 = vdwg.mxu0
  %v1516 = vadd.f32 %v254, %v1511
  %v1517 = vxor.u32 %v1516, 2147483648
  %v1518 = vmul.f32 %v1517, 1.442695
  %v1519 = vpow.pop %v1518
  %v1520 = vadd.f32 %v1519, 1.0
  %v1521 = vrcp.pop %v1520
  %v1522 = vmul.f32 1.0, %v1521
  %1523 = vrot.lane.b32.xlu0 %v1522, 64
  %v1524 = vpop.permute.xlu0 %1523
  %v1525 = vadd.f32 %v1511, %v363
  %v1526 = vmul.f32 %v1524, %v1525
  %v1527 = vadd.f32 %v254, %v1526
  %v1528 = vtanh.pop %v1527
  %1529 = vrot.lane.b32.xlu0 %v1522, 96
  %v1530 = vpop.permute.xlu0 %1529
  %1531 = vrot.lane.b32.xlu0 %v1528, 64
  %v1532 = vpop.permute.xlu0 %1531
  %v1533 = vsub.f32 1.0, %v1530
  %v1534 = vmul.f32 %v1533, %v1532
  %v1535 = vmul.f32 %v1530, %v1371
  %v1536 = vadd.f32 %v1534, %v1535
  %v1537 = vpack.c.bf16 %v1536, %v1536
  %1538 = vmatprep.subr.bf16.mxu0 0
  %1539 = vmatpush1.bf16.msra.mxu0 %v478
  %1540 = vmatprep.subr.bf16.mxu0 0
  %1541 = vmatpush1.bf16.msra.mxu0 %v479
  %1542 = vmatprep.subr.bf16.mxu0 0
  %1543 = vmatpush1.bf16.msra.mxu0 %v480
  %1544 = vmatprep.subr.bf16.mxu0 0
  %1545 = vmatpush1.bf16.msra.mxu0 %v481
  %1546 = vmatprep.subr.bf16.mxu0 0
  %1547 = vmatpush1.bf16.msra.mxu0 %v482
  %1548 = vmatprep.subr.bf16.mxu0 0
  %1549 = vmatpush1.bf16.msra.mxu0 %v483
  %1550 = vmatprep.subr.bf16.mxu0 0
  %1551 = vmatpush1.bf16.msra.mxu0 %v484
  %1552 = vmatprep.subr.bf16.mxu0 0
  %1553 = vmatpush1.bf16.msra.mxu0 %v485
  %1554 = vmatprep.subr.bf16.mxu0 0
  %1555 = vmatpush1.bf16.msra.mxu0 0
  %1556 = vmatprep.subr.bf16.mxu0 0
  %1557 = vmatpush1.bf16.msra.mxu0 0
  %1558 = vmatprep.subr.bf16.mxu0 0
  %1559 = vmatpush1.bf16.msra.mxu0 0
  %1560 = vmatprep.subr.bf16.mxu0 0
  %1561 = vmatpush1.bf16.msra.mxu0 0
  %1562 = vmatprep.subr.bf16.mxu0 0
  %1563 = vmatpush1.bf16.msra.mxu0 0
  %1564 = vmatprep.subr.bf16.mxu0 0
  %1565 = vmatpush1.bf16.msra.mxu0 0
  %1566 = vmatprep.subr.bf16.mxu0 0
  %1567 = vmatpush1.bf16.msra.mxu0 0
  %1568 = vmatprep.subr.bf16.mxu0 0
  %1569 = vmatpush1.bf16.msra.mxu0 0
  %1570 = vmatprep.mubr.bf16.mxu0 0
  %1571 = vmatmul.mubr.bf16.gmra.mrb[0].mxu0 %v1372
  %v1572 = vpop.f32.mrb[0].mxu0
  %v1573 = vadd.f32 %v444, %v1572
  %v1574 = vpop.f32.mrb[0].mxu0
  %v1575 = vpop.f32.mrb[0].mxu0
  %v1576 = vpop.f32.mrb[0].mxu0
  %1577 = vdwg.mxu0
  %1578 = vmatprep.subr.bf16.mxu0 0
  %1579 = vmatpush1.bf16.msra.mxu0 %v566
  %1580 = vmatprep.subr.bf16.mxu0 0
  %1581 = vmatpush1.bf16.msra.mxu0 %v567
  %1582 = vmatprep.subr.bf16.mxu0 0
  %1583 = vmatpush1.bf16.msra.mxu0 %v568
  %1584 = vmatprep.subr.bf16.mxu0 0
  %1585 = vmatpush1.bf16.msra.mxu0 %v569
  %1586 = vmatprep.subr.bf16.mxu0 0
  %1587 = vmatpush1.bf16.msra.mxu0 %v570
  %1588 = vmatprep.subr.bf16.mxu0 0
  %1589 = vmatpush1.bf16.msra.mxu0 %v571
  %1590 = vmatprep.subr.bf16.mxu0 0
  %1591 = vmatpush1.bf16.msra.mxu0 %v572
  %1592 = vmatprep.subr.bf16.mxu0 0
  %1593 = vmatpush1.bf16.msra.mxu0 %v573
  %1594 = vmatprep.subr.bf16.mxu0 0
  %1595 = vmatpush1.bf16.msra.mxu0 0
  %1596 = vmatprep.subr.bf16.mxu0 0
  %1597 = vmatpush1.bf16.msra.mxu0 0
  %1598 = vmatprep.subr.bf16.mxu0 0
  %1599 = vmatpush1.bf16.msra.mxu0 0
  %1600 = vmatprep.subr.bf16.mxu0 0
  %1601 = vmatpush1.bf16.msra.mxu0 0
  %1602 = vmatprep.subr.bf16.mxu0 0
  %1603 = vmatpush1.bf16.msra.mxu0 0
  %1604 = vmatprep.subr.bf16.mxu0 0
  %1605 = vmatpush1.bf16.msra.mxu0 0
  %1606 = vmatprep.subr.bf16.mxu0 0
  %1607 = vmatpush1.bf16.msra.mxu0 0
  %1608 = vmatprep.subr.bf16.mxu0 0
  %1609 = vmatpush1.bf16.msra.mxu0 0
  %1610 = vmatprep.mubr.bf16.mxu0 0
  %1611 = vmatmul.mubr.bf16.gmra.mrb[0].mxu0 %v1474
  %v1612 = vpop.f32.mrb[0].mxu0
  %v1613 = vadd.f32 0.0, %v1612
  %v1614 = vpop.f32.mrb[0].mxu0
  %v1615 = vpop.f32.mrb[0].mxu0
  %v1616 = vpop.f32.mrb[0].mxu0
  %1617 = vdwg.mxu0
  %v1618 = vadd.f32 %v1573, %v1613
  %v1619 = vxor.u32 %v1618, 2147483648
  %v1620 = vmul.f32 %v1619, 1.442695
  %v1621 = vpow.pop %v1620
  %v1622 = vadd.f32 %v1621, 1.0
  %v1623 = vrcp.pop %v1622
  %v1624 = vmul.f32 1.0, %v1623
  %1625 = vrot.lane.b32.xlu0 %v1624, 64
  %v1626 = vpop.permute.xlu0 %1625
  %v1627 = vadd.f32 %v1613, %v635
  %v1628 = vmul.f32 %v1626, %v1627
  %v1629 = vadd.f32 %v1573, %v1628
  %v1630 = vtanh.pop %v1629
  %1631 = vrot.lane.b32.xlu0 %v1624, 96
  %v1632 = vpop.permute.xlu0 %1631
  %1633 = vrot.lane.b32.xlu0 %v1630, 64
  %v1634 = vpop.permute.xlu0 %1633
  %v1635 = vsub.f32 1.0, %v1632
  %v1636 = vmul.f32 %v1635, %v1634
  %v1637 = vmul.f32 %v1632, %v1473
  %v1638 = vadd.f32 %v1636, %v1637
  %v1639 = vpack.c.bf16 %v1638, %v1638
  %1640 = vst [vmem:[%s10 + $0x30] sm:$0xff] %v1638
  %1641 = vmatprep.subr.bf16.mxu0 0
  %1642 = vmatpush1.bf16.msra.mxu0 %v478
  %1643 = vmatprep.subr.bf16.mxu0 0
  %1644 = vmatpush1.bf16.msra.mxu0 %v479
  %1645 = vmatprep.subr.bf16.mxu0 0
  %1646 = vmatpush1.bf16.msra.mxu0 %v480
  %1647 = vmatprep.subr.bf16.mxu0 0
  %1648 = vmatpush1.bf16.msra.mxu0 %v481
  %1649 = vmatprep.subr.bf16.mxu0 0
  %1650 = vmatpush1.bf16.msra.mxu0 %v482
  %1651 = vmatprep.subr.bf16.mxu0 0
  %1652 = vmatpush1.bf16.msra.mxu0 %v483
  %1653 = vmatprep.subr.bf16.mxu0 0
  %1654 = vmatpush1.bf16.msra.mxu0 %v484
  %1655 = vmatprep.subr.bf16.mxu0 0
  %1656 = vmatpush1.bf16.msra.mxu0 %v485
  %1657 = vmatprep.subr.bf16.mxu0 0
  %1658 = vmatpush1.bf16.msra.mxu0 0
  %1659 = vmatprep.subr.bf16.mxu0 0
  %1660 = vmatpush1.bf16.msra.mxu0 0
  %1661 = vmatprep.subr.bf16.mxu0 0
  %1662 = vmatpush1.bf16.msra.mxu0 0
  %1663 = vmatprep.subr.bf16.mxu0 0
  %1664 = vmatpush1.bf16.msra.mxu0 0
  %1665 = vmatprep.subr.bf16.mxu0 0
  %1666 = vmatpush1.bf16.msra.mxu0 0
  %1667 = vmatprep.subr.bf16.mxu0 0
  %1668 = vmatpush1.bf16.msra.mxu0 0
  %1669 = vmatprep.subr.bf16.mxu0 0
  %1670 = vmatpush1.bf16.msra.mxu0 0
  %1671 = vmatprep.subr.bf16.mxu0 0
  %1672 = vmatpush1.bf16.msra.mxu0 0
  %1673 = vmatprep.mubr.bf16.mxu0 0
  %1674 = vmatmul.mubr.bf16.gmra.mrb[0].mxu0 %v1537
  %v1675 = vpop.f32.mrb[0].mxu0
  %v1676 = vadd.f32 %v444, %v1675
  %v1677 = vpop.f32.mrb[0].mxu0
  %v1678 = vpop.f32.mrb[0].mxu0
  %v1679 = vpop.f32.mrb[0].mxu0
  %1680 = vdwg.mxu0
  %1681 = vmatprep.subr.bf16.mxu0 0
  %1682 = vmatpush1.bf16.msra.mxu0 %v566
  %1683 = vmatprep.subr.bf16.mxu0 0
  %1684 = vmatpush1.bf16.msra.mxu0 %v567
  %1685 = vmatprep.subr.bf16.mxu0 0
  %1686 = vmatpush1.bf16.msra.mxu0 %v568
  %1687 = vmatprep.subr.bf16.mxu0 0
  %1688 = vmatpush1.bf16.msra.mxu0 %v569
  %1689 = vmatprep.subr.bf16.mxu0 0
  %1690 = vmatpush1.bf16.msra.mxu0 %v570
  %1691 = vmatprep.subr.bf16.mxu0 0
  %1692 = vmatpush1.bf16.msra.mxu0 %v571
  %1693 = vmatprep.subr.bf16.mxu0 0
  %1694 = vmatpush1.bf16.msra.mxu0 %v572
  %1695 = vmatprep.subr.bf16.mxu0 0
  %1696 = vmatpush1.bf16.msra.mxu0 %v573
  %1697 = vmatprep.subr.bf16.mxu0 0
  %1698 = vmatpush1.bf16.msra.mxu0 0
  %1699 = vmatprep.subr.bf16.mxu0 0
  %1700 = vmatpush1.bf16.msra.mxu0 0
  %1701 = vmatprep.subr.bf16.mxu0 0
  %1702 = vmatpush1.bf16.msra.mxu0 0
  %1703 = vmatprep.subr.bf16.mxu0 0
  %1704 = vmatpush1.bf16.msra.mxu0 0
  %1705 = vmatprep.subr.bf16.mxu0 0
  %1706 = vmatpush1.bf16.msra.mxu0 0
  %1707 = vmatprep.subr.bf16.mxu0 0
  %1708 = vmatpush1.bf16.msra.mxu0 0
  %1709 = vmatprep.subr.bf16.mxu0 0
  %1710 = vmatpush1.bf16.msra.mxu0 0
  %1711 = vmatprep.subr.bf16.mxu0 0
  %1712 = vmatpush1.bf16.msra.mxu0 0
  %1713 = vmatprep.mubr.bf16.mxu0 0
  %1714 = vmatmul.mubr.bf16.gmra.mrb[0].mxu0 %v1639
  %v1715 = vpop.f32.mrb[0].mxu0
  %v1716 = vadd.f32 0.0, %v1715
  %v1717 = vpop.f32.mrb[0].mxu0
  %v1718 = vpop.f32.mrb[0].mxu0
  %v1719 = vpop.f32.mrb[0].mxu0
  %1720 = vdwg.mxu0
  %v1721 = vadd.f32 %v1676, %v1716
  %v1722 = vxor.u32 %v1721, 2147483648
  %v1723 = vmul.f32 %v1722, 1.442695
  %v1724 = vpow.pop %v1723
  %v1725 = vadd.f32 %v1724, 1.0
  %v1726 = vrcp.pop %v1725
  %v1727 = vmul.f32 1.0, %v1726
  %1728 = vrot.lane.b32.xlu0 %v1727, 64
  %v1729 = vpop.permute.xlu0 %1728
  %v1730 = vadd.f32 %v1716, %v635
  %v1731 = vmul.f32 %v1729, %v1730
  %v1732 = vadd.f32 %v1676, %v1731
  %v1733 = vtanh.pop %v1732
  %1734 = vrot.lane.b32.xlu0 %v1727, 96
  %v1735 = vpop.permute.xlu0 %1734
  %1736 = vrot.lane.b32.xlu0 %v1733, 64
  %v1737 = vpop.permute.xlu0 %1736
  %v1738 = vsub.f32 1.0, %v1735
  %v1739 = vmul.f32 %v1738, %v1737
  %v1740 = vmul.f32 %v1735, %v1638
  %v1741 = vadd.f32 %v1739, %v1740
  %1742 = vst [vmem:[%s10 + $0x38] sm:$0xff] %v1741
  %1743 = vst [vmem:[%s11] sm:$0xff] %v1536
  %s1744 = scalar_lea.vmem %s11, 8
  %1745 = vst [vmem:[%s1744] sm:$0xff] %v1741
  // Predicated region
  $region42: #{toy_nn_forward.1} parent=0 // pred_check
    _
  $region43: #{toy_nn_forward.1} parent=0 // pred_check_branch
    %1747 = sbr.rel (0) target = $region45
  $region44: #{toy_nn_forward.1} parent=0 // pred_region
    _
  $region45: #{toy_nn_forward.1} parent=0 // pred_fallthru
    _
  // Predicated region
  $region46: #{toy_nn_forward.1} parent=0 // pred_check
    _
  $region47: #{toy_nn_forward.1} parent=0 // pred_check_branch
    %1749 = sbr.rel (0) target = $region49
  $region48: #{toy_nn_forward.1} parent=0 // pred_region
    _
  $region49: #{toy_nn_forward.1} parent=0 // pred_fallthru
    _
  // Predicated region
  $region50: #{toy_nn_forward.1} parent=0 // pred_check
    _
  $region51: #{toy_nn_forward.1} parent=0 // pred_check_branch
    %1751 = sbr.rel (0) target = $region53
  $region52: #{toy_nn_forward.1} parent=0 // pred_region
    _
  $region53: #{toy_nn_forward.1} parent=0 // pred_fallthru
    _
  // Predicated region
  $region54: #{toy_nn_forward.1} parent=0 // pred_check
    _
  $region55: #{toy_nn_forward.1} parent=0 // pred_check_branch
    %1753 = sbr.rel (0) target = $region57
  $region56: #{toy_nn_forward.1} parent=0 // pred_region
    _
  $region57: #{toy_nn_forward.1} parent=0 // pred_fallthru
    _

</llo_original>
